<compile_context>
chip_gen: v7x
topology: tpu7x:2x2x1
jax: 0.10.0
libtpu: 0.0.40
codegen_flags: <defaults>
</compile_context>

<pallas_src>
import functools

import jax
import jax.numpy as jnp
from jax.experimental import pallas as pl
from jax.experimental.pallas import tpu as pltpu


def _round_up(x, m):
    return (x + m - 1) // m * m


def _actor_kernel(s_ref, act_ref,
                  w1s_ref, w1a_ref, b1_ref,
                  w2_ref, b2_ref,
                  w3_ref, b3_ref,
                  out_ref, *, threshold, max_action):
    """One batch tile of the BCQ Actor MLP."""
    act_f32 = act_ref[...]

    # l1: state @ W1[:sd] + action @ W1[sd:] + b1, relu  (no concat needed)
    h1 = jnp.dot(s_ref[...].astype(jnp.bfloat16), w1s_ref[...],
                 preferred_element_type=jnp.float32)
    h1 = h1 + jnp.dot(act_f32.astype(jnp.bfloat16), w1a_ref[...],
                      preferred_element_type=jnp.float32)
    h1 = jnp.maximum(h1 + b1_ref[...], 0.0)

    # l2 + relu
    h2 = jnp.dot(h1.astype(jnp.bfloat16), w2_ref[...],
                 preferred_element_type=jnp.float32) + b2_ref[...]
    h2 = jnp.maximum(h2, 0.0)

    # l3 -> threshold * max_action * tanh(.)
    a = jnp.dot(h2.astype(jnp.bfloat16), w3_ref[...],
                preferred_element_type=jnp.float32) + b3_ref[...]
    a = (threshold * max_action) * jnp.tanh(a)

    # (a + action).clamp(-max_action, max_action)
    out_ref[...] = jnp.clip(a + act_f32, -max_action, max_action)


def actor_forward(state, action, params, *, max_action, threshold=0.05,
                  block_b=256):
    """Pallas implementation of BCQ Actor.forward(state, action)."""
    w1s, w1a, b1, w2, b2, w3, b3 = params
    B, sd = state.shape
    ad = action.shape[1]
    h1_dim = w1s.shape[1]
    h2_dim = w2.shape[1]

    # Batch tiling: a single block when B is small, otherwise TB-row tiles
    # on a parallel grid axis (sharded across TensorCores on v7x).
    tb = min(block_b, _round_up(B, 8))
    b_pad = _round_up(B, tb)
    if b_pad != B:
        pad = b_pad - B
        state = jnp.pad(state, ((0, pad), (0, 0)))
        action = jnp.pad(action, ((0, pad), (0, 0)))
    grid = (b_pad // tb,)

    kernel = functools.partial(
        _actor_kernel, threshold=float(threshold), max_action=float(max_action))

    def batch_spec(shape):
        return pl.BlockSpec(shape, lambda i: (i, 0))

    def full_spec(shape):
        return pl.BlockSpec(shape, lambda i: (0, 0))

    flops = 2 * B * (sd * h1_dim + ad * h1_dim + h1_dim * h2_dim + h2_dim * ad)
    bytes_accessed = (
        2 * (sd * h1_dim + ad * h1_dim + h1_dim * h2_dim + h2_dim * ad)  # bf16 W
        + 4 * (h1_dim + h2_dim + ad)                                     # f32 biases
        + 4 * B * (sd + 2 * ad))                                         # activations

    out = pl.pallas_call(
        kernel,
        out_shape=jax.ShapeDtypeStruct((b_pad, ad), jnp.float32),
        grid=grid,
        in_specs=[
            batch_spec((tb, sd)),          # state tile
            batch_spec((tb, ad)),          # action tile
            full_spec((sd, h1_dim)),       # W1 (state part), bf16
            full_spec((ad, h1_dim)),       # W1 (action part), bf16
            full_spec((1, h1_dim)),        # b1, f32
            full_spec((h1_dim, h2_dim)),   # W2, bf16
            full_spec((1, h2_dim)),        # b2, f32
            full_spec((h2_dim, ad)),       # W3, bf16
            full_spec((1, ad)),            # b3, f32
        ],
        out_specs=batch_spec((tb, ad)),
        compiler_params=pltpu.CompilerParams(
            dimension_semantics=("parallel",)),
        cost_estimate=pl.CostEstimate(
            flops=flops, transcendentals=B * ad, bytes_accessed=bytes_accessed),
    )(state, action, w1s, w1a, b1, w2, b2, w3, b3)

    return out[:B] if b_pad != B else out


def init_actor_params(key, state_dim, action_dim, hidden1=400, hidden2=300):
    """PyTorch-nn.Linear-style uniform init; weights stored [in, out].

    W1 is split into (state part, action part) so the kernel avoids a concat;
    matmul weights are stored bf16 (halves HBM traffic, native MXU path),
    biases stay f32.
    """
    def linear(k, fan_in, fan_out):
        kw, kb = jax.random.split(k)
        bound = 1.0 / jnp.sqrt(float(fan_in))
        w = jax.random.uniform(kw, (fan_in, fan_out), jnp.float32, -bound, bound)
        b = jax.random.uniform(kb, (1, fan_out), jnp.float32, -bound, bound)
        return w, b

    k1, k2, k3 = jax.random.split(key, 3)
    w1, b1 = linear(k1, state_dim + action_dim, hidden1)
    w2, b2 = linear(k2, hidden1, hidden2)
    w3, b3 = linear(k3, hidden2, action_dim)
    w1s = w1[:state_dim].astype(jnp.bfloat16)
    w1a = w1[state_dim:].astype(jnp.bfloat16)
    return (w1s, w1a, b1,
            w2.astype(jnp.bfloat16), b2,
            w3.astype(jnp.bfloat16), b3)


def actor_reference(state, action, params, *, max_action, threshold=0.05):
    """Pure-JAX f32 reference (same bf16-stored weights, upcast to f32)."""
    w1s, w1a, b1, w2, b2, w3, b3 = params
    f32 = lambda t: t.astype(jnp.float32)
    h1 = jax.nn.relu(state @ f32(w1s) + action @ f32(w1a) + b1)
    h2 = jax.nn.relu(h1 @ f32(w2) + b2)
    a = threshold * max_action * jnp.tanh(h2 @ f32(w3) + b3)
    return jnp.clip(a + action, -max_action, max_action)


if __name__ == "__main__":
    state_dim = 16
    action_dim = 8
    batch = 60      # not a multiple of the tile -> exercises the padding path
    block_b = 32    # 2 batch tiles -> exercises the parallel grid axis
    max_action = 1.0
    threshold = 0.05

    key = jax.random.PRNGKey(0)
    k_params, k_state, k_action = jax.random.split(key, 3)

    params = init_actor_params(k_params, state_dim, action_dim)
    state = jax.random.normal(k_state, (batch, state_dim), jnp.float32)
    action = jnp.tanh(jax.random.normal(k_action, (batch, action_dim), jnp.float32))

    out = actor_forward(state, action, params,
                        max_action=max_action, threshold=threshold,
                        block_b=block_b)
    out = jax.block_until_ready(out)

    ref = actor_reference(state, action, params,
                          max_action=max_action, threshold=threshold)
    assert out.shape == (batch, action_dim)
    assert jnp.allclose(out, ref, atol=2e-2, rtol=1e-2), "mismatch vs reference"

    print("KERNEL_OK")
</pallas_src>

<mosaic_0001>
module attributes {stable_mosaic.version = 11 : i64} {
  func.func @_actor_kernel(%arg0: i32, %arg1: memref<32x16xf32, #tpu.memory_space<vmem>>, %arg2: memref<32x8xf32, #tpu.memory_space<vmem>>, %arg3: memref<16x400xbf16, #tpu.memory_space<vmem>>, %arg4: memref<8x400xbf16, #tpu.memory_space<vmem>>, %arg5: memref<1x400xf32, #tpu.memory_space<vmem>>, %arg6: memref<400x300xbf16, #tpu.memory_space<vmem>>, %arg7: memref<1x300xf32, #tpu.memory_space<vmem>>, %arg8: memref<300x8xbf16, #tpu.memory_space<vmem>>, %arg9: memref<1x8xf32, #tpu.memory_space<vmem>>, %arg10: memref<32x8xf32, #tpu.memory_space<vmem>>) attributes {dimension_semantics = [#tpu.dimension_semantics<parallel>], iteration_bounds = array<i64: 2>, scalar_prefetch = 0 : i64, scratch_operands = 0 : i64, tpu.core_type = #tpu.core_type<tc>, window_params = [{transform_indices = @transform_0, window_bounds = array<i64: 32, 16>}, {transform_indices = @transform_1, window_bounds = array<i64: 32, 8>}, {pipeline_mode = #tpu.pipeline_mode<synchronous>, transform_indices = @transform_2, window_bounds = array<i64: 16, 400>}, {pipeline_mode = #tpu.pipeline_mode<synchronous>, transform_indices = @transform_3, window_bounds = array<i64: 8, 400>}, {pipeline_mode = #tpu.pipeline_mode<synchronous>, transform_indices = @transform_4, window_bounds = array<i64: 1, 400>}, {pipeline_mode = #tpu.pipeline_mode<synchronous>, transform_indices = @transform_5, window_bounds = array<i64: 400, 300>}, {pipeline_mode = #tpu.pipeline_mode<synchronous>, transform_indices = @transform_6, window_bounds = array<i64: 1, 300>}, {pipeline_mode = #tpu.pipeline_mode<synchronous>, transform_indices = @transform_7, window_bounds = array<i64: 300, 8>}, {pipeline_mode = #tpu.pipeline_mode<synchronous>, transform_indices = @transform_8, window_bounds = array<i64: 1, 8>}, {transform_indices = @transform_9, window_bounds = array<i64: 32, 8>}]} {
    %c0 = arith.constant 0 : index
    %c0_0 = arith.constant 0 : index
    %0 = vector.load %arg2[%c0, %c0_0] : memref<32x8xf32, #tpu.memory_space<vmem>>, vector<32x8xf32>
    %c0_1 = arith.constant 0 : index
    %c0_2 = arith.constant 0 : index
    %1 = vector.load %arg1[%c0_1, %c0_2] : memref<32x16xf32, #tpu.memory_space<vmem>>, vector<32x16xf32>
    %2 = arith.truncf %1 : vector<32x16xf32> to vector<32x16xbf16>
    %c0_3 = arith.constant 0 : index
    %c0_4 = arith.constant 0 : index
    %3 = vector.load %arg3[%c0_3, %c0_4] : memref<16x400xbf16, #tpu.memory_space<vmem>>, vector<16x400xbf16>
    %cst = arith.constant dense<0.000000e+00> : vector<32x400xf32>
    %4 = tpu.matmul %2, %3, %cst {dimension_numbers = #tpu.dot_dimension_numbers<[1], [0], [0], [1], [0, 0, 1, 1], [], []>} : vector<32x16xbf16>, vector<16x400xbf16>, vector<32x400xf32> -> vector<32x400xf32>
    %5 = arith.truncf %0 : vector<32x8xf32> to vector<32x8xbf16>
    %c0_5 = arith.constant 0 : index
    %c0_6 = arith.constant 0 : index
    %6 = vector.load %arg4[%c0_5, %c0_6] : memref<8x400xbf16, #tpu.memory_space<vmem>>, vector<8x400xbf16>
    %cst_7 = arith.constant dense<0.000000e+00> : vector<32x400xf32>
    %7 = tpu.matmul %5, %6, %cst_7 {dimension_numbers = #tpu.dot_dimension_numbers<[1], [0], [0], [1], [0, 0, 1, 1], [], []>} : vector<32x8xbf16>, vector<8x400xbf16>, vector<32x400xf32> -> vector<32x400xf32>
    %8 = arith.addf %4, %7 : vector<32x400xf32>
    %c0_8 = arith.constant 0 : index
    %c0_9 = arith.constant 0 : index
    %9 = vector.load %arg5[%c0_8, %c0_9] : memref<1x400xf32, #tpu.memory_space<vmem>>, vector<1x400xf32>
    %10 = vector.broadcast %9 : vector<1x400xf32> to vector<32x400xf32>
    %11 = arith.addf %8, %10 : vector<32x400xf32>
    %cst_10 = arith.constant 0.000000e+00 : f32
    %12 = vector.broadcast %cst_10 : f32 to vector<32x400xf32>
    %13 = arith.maximumf %11, %12 : vector<32x400xf32>
    %14 = arith.truncf %13 : vector<32x400xf32> to vector<32x400xbf16>
    %c0_11 = arith.constant 0 : index
    %c0_12 = arith.constant 0 : index
    %15 = vector.load %arg6[%c0_11, %c0_12] : memref<400x300xbf16, #tpu.memory_space<vmem>>, vector<400x300xbf16>
    %cst_13 = arith.constant dense<0.000000e+00> : vector<32x300xf32>
    %16 = tpu.matmul %14, %15, %cst_13 {dimension_numbers = #tpu.dot_dimension_numbers<[1], [0], [0], [1], [0, 0, 1, 1], [], []>} : vector<32x400xbf16>, vector<400x300xbf16>, vector<32x300xf32> -> vector<32x300xf32>
    %c0_14 = arith.constant 0 : index
    %c0_15 = arith.constant 0 : index
    %17 = vector.load %arg7[%c0_14, %c0_15] : memref<1x300xf32, #tpu.memory_space<vmem>>, vector<1x300xf32>
    %18 = vector.broadcast %17 : vector<1x300xf32> to vector<32x300xf32>
    %19 = arith.addf %16, %18 : vector<32x300xf32>
    %cst_16 = arith.constant 0.000000e+00 : f32
    %20 = vector.broadcast %cst_16 : f32 to vector<32x300xf32>
    %21 = arith.maximumf %19, %20 : vector<32x300xf32>
    %22 = arith.truncf %21 : vector<32x300xf32> to vector<32x300xbf16>
    %c0_17 = arith.constant 0 : index
    %c0_18 = arith.constant 0 : index
    %23 = vector.load %arg8[%c0_17, %c0_18] : memref<300x8xbf16, #tpu.memory_space<vmem>>, vector<300x8xbf16>
    %cst_19 = arith.constant dense<0.000000e+00> : vector<32x8xf32>
    %24 = tpu.matmul %22, %23, %cst_19 {dimension_numbers = #tpu.dot_dimension_numbers<[1], [0], [0], [1], [0, 0, 1, 1], [], []>} : vector<32x300xbf16>, vector<300x8xbf16>, vector<32x8xf32> -> vector<32x8xf32>
    %c0_20 = arith.constant 0 : index
    %c0_21 = arith.constant 0 : index
    %25 = vector.load %arg9[%c0_20, %c0_21] : memref<1x8xf32, #tpu.memory_space<vmem>>, vector<1x8xf32>
    %26 = vector.broadcast %25 : vector<1x8xf32> to vector<32x8xf32>
    %27 = arith.addf %24, %26 : vector<32x8xf32>
    %28 = math.tanh %27 : vector<32x8xf32>
    %cst_22 = arith.constant 5.000000e-02 : f32
    %29 = vector.broadcast %cst_22 : f32 to vector<32x8xf32>
    %30 = arith.mulf %29, %28 : vector<32x8xf32>
    %31 = arith.addf %30, %0 : vector<32x8xf32>
    %cst_23 = arith.constant -1.000000e+00 : f32
    %cst_24 = arith.constant 1.000000e+00 : f32
    %32 = vector.broadcast %cst_23 : f32 to vector<32x8xf32>
    %33 = arith.maximumf %32, %31 : vector<32x8xf32>
    %34 = vector.broadcast %cst_24 : f32 to vector<32x8xf32>
    %35 = arith.minimumf %34, %33 : vector<32x8xf32>
    %c0_25 = arith.constant 0 : index
    %c0_26 = arith.constant 0 : index
    %36 = vector.load %arg10[%c0_25, %c0_26] : memref<32x8xf32, #tpu.memory_space<vmem>>, vector<32x8xf32>
    tpu.vector_store %arg10[%c0_25, %c0_26], %35 {strides = array<i32>} : memref<32x8xf32, #tpu.memory_space<vmem>>, vector<32x8xf32>,
    return
  }
  func.func @transform_0(%arg0: i32) -> (i32, i32) {
    %c0_i32 = arith.constant 0 : i32
    %c0_i32_0 = arith.constant 0 : i32
    return %arg0, %c0_i32 : i32, i32
  }
  func.func @transform_1(%arg0: i32) -> (i32, i32) {
    %c0_i32 = arith.constant 0 : i32
    %c0_i32_0 = arith.constant 0 : i32
    return %arg0, %c0_i32 : i32, i32
  }
  func.func @transform_2(%arg0: i32) -> (i32, i32) {
    %c0_i32 = arith.constant 0 : i32
    %c0_i32_0 = arith.constant 0 : i32
    %c0_i32_1 = arith.constant 0 : i32
    return %c0_i32, %c0_i32_0 : i32, i32
  }
  func.func @transform_3(%arg0: i32) -> (i32, i32) {
    %c0_i32 = arith.constant 0 : i32
    %c0_i32_0 = arith.constant 0 : i32
    %c0_i32_1 = arith.constant 0 : i32
    return %c0_i32, %c0_i32_0 : i32, i32
  }
  func.func @transform_4(%arg0: i32) -> (i32, i32) {
    %c0_i32 = arith.constant 0 : i32
    %c0_i32_0 = arith.constant 0 : i32
    %c0_i32_1 = arith.constant 0 : i32
    return %c0_i32, %c0_i32_0 : i32, i32
  }
  func.func @transform_5(%arg0: i32) -> (i32, i32) {
    %c0_i32 = arith.constant 0 : i32
    %c0_i32_0 = arith.constant 0 : i32
    %c0_i32_1 = arith.constant 0 : i32
    return %c0_i32, %c0_i32_0 : i32, i32
  }
  func.func @transform_6(%arg0: i32) -> (i32, i32) {
    %c0_i32 = arith.constant 0 : i32
    %c0_i32_0 = arith.constant 0 : i32
    %c0_i32_1 = arith.constant 0 : i32
    return %c0_i32, %c0_i32_0 : i32, i32
  }
  func.func @transform_7(%arg0: i32) -> (i32, i32) {
    %c0_i32 = arith.constant 0 : i32
    %c0_i32_0 = arith.constant 0 : i32
    %c0_i32_1 = arith.constant 0 : i32
    return %c0_i32, %c0_i32_0 : i32, i32
  }
  func.func @transform_8(%arg0: i32) -> (i32, i32) {
    %c0_i32 = arith.constant 0 : i32
    %c0_i32_0 = arith.constant 0 : i32
    %c0_i32_1 = arith.constant 0 : i32
    return %c0_i32, %c0_i32_0 : i32, i32
  }
  func.func @transform_9(%arg0: i32) -> (i32, i32) {
    %c0_i32 = arith.constant 0 : i32
    %c0_i32_0 = arith.constant 0 : i32
    return %arg0, %c0_i32 : i32, i32
  }
}

</mosaic_0001>

<llo_original>
// kernel: tpu_custom_call.1
$region0: #{tpu_custom_call.1}
  #allocation0 [shape = 'u32[]', space=smem, size = 0x4, offset = 0x4, fixed_abs, tag = 'smem constant byte address 0x4 - core index']
  #allocation1 [shape = 'u32[144,128]{1,0:T(1,128)}', space=vmem, size = 0x12000, scoped, tag = 'internal scratch']
  %s0 = inlined_call_operand.vmem [shape: f32[64,16], index: 0, kind: input, shape index: {}]
  %s1 = inlined_call_operand.vmem [shape: f32[64,8], index: 1, kind: input, shape index: {}]
  %s2 = inlined_call_operand.vmem [shape: bf16[16,400], index: 2, kind: input, shape index: {}]
  %s3 = inlined_call_operand.vmem [shape: bf16[8,400], index: 3, kind: input, shape index: {}]
  %s4 = inlined_call_operand.vmem [shape: f32[1,400], index: 4, kind: input, shape index: {}]
  %s5 = inlined_call_operand.hbm [shape: bf16[400,300], index: 5, kind: input, shape index: {}]
  %s6 = inlined_call_operand.vmem [shape: f32[1,300], index: 6, kind: input, shape index: {}]
  %s7 = inlined_call_operand.vmem [shape: bf16[300,8], index: 7, kind: input, shape index: {}]
  %s8 = inlined_call_operand.vmem [shape: f32[1,8], index: 8, kind: input, shape index: {}]
  %s9 = inlined_call_operand.vmem [shape: f32[64,8], index: 9, kind: output, shape index: {}]
  %s10 = sld [smem:[#allocation0]]
  $region73: #{tpu_custom_call.1} parent=0
    _
  %s12 = ssub.s32 1, %s10
  %s13 = scalar_select 0, %s12, %s10
  $region1: #{tpu_custom_call.1} parent=0
    #allocation2 [shape = 'u8[307200]{0}', space=vmem, size = 0x4b000, scoped, tag = 'input window, operand 5, single buffered']
    #allocation3 [shape = 's32[2]{0}', space=sflag, size = 0x8, scoped, tag = 'scoped memory for tpu_custom_call.1']
    %14 = vsyncpa [#allocation3], 0
    loop: start=0, step=1, limit=4
    $region2: #{tpu_custom_call.1} parent=1 // loop_pre_header
      _
    $region3: #{tpu_custom_call.1} parent=1 // loop_header
      %s16 = sphi 0, %s20
      %p17 = scmp.ge.s32.totalorder %s16, 4
      %s26 = sphi 0, %s28
      %s29 = sphi 0, %s26
      %s30 = sphi 0, %s29
      %s46 = sphi 0, %s30
      %s52 = sphi 0, %s54
      %s55 = sphi 0, %s52
      %s56 = sphi 0, %s55
      %s72 = sphi 0, %s56
      %s76 = sphi 0, %s76
      %s78 = sphi 0, %s76
      %s79 = sphi 0, %s78
      %s93 = sphi 0, %s79
      %s97 = sphi 0, %s97
      %s99 = sphi 0, %s97
      %s100 = sphi 0, %s99
      %s114 = sphi 0, %s100
      %s118 = sphi 0, %s118
      %s120 = sphi 0, %s118
      %s121 = sphi 0, %s120
      %s135 = sphi 0, %s121
      %s139 = sphi 0, %s139
      %s141 = sphi 0, %s139
      %s142 = sphi 0, %s141
      %s156 = sphi 0, %s142
      %s160 = sphi 0, %s160
      %s162 = sphi 0, %s160
      %s163 = sphi 0, %s162
      %s177 = sphi 0, %s163
      %s181 = sphi 0, %s181
      %s183 = sphi 0, %s181
      %s184 = sphi 0, %s183
      %s198 = sphi 0, %s184
      %s202 = sphi 0, %s202
      %s204 = sphi 0, %s202
      %s205 = sphi 0, %s204
      %s219 = sphi 0, %s205
      %s225 = sphi 0, %s227
      %s228 = sphi 0, %s225
      %s229 = sphi 0, %s228
      %s245 = sphi 0, %s229
    $region4: #{tpu_custom_call.1} parent=1 // loop_header_branch
      %19 = sbr.rel (%p17) target = $region8
    $region5: #{tpu_custom_call.1} parent=1 // loop_body
      %s21 = ssub.s32 %s16, 1
      %s22 = ssub.s32 %s16, 2
      %s23 = sadd.s32 %s16, 1
      %s24 = ssub.s32 %s16, %s23
      %p25 = scmp.eq.s32.totalorder %s24, 0
      %s27 = sadd.s32 %s26, 1
      %s28 = scalar_select %p25, %s26, %s27
      %p31 = pneg %p25
      %p32 = scmp.eq.s32.totalorder %s16, 1
      %p33 = por %p31, %p32
      %p34 = scmp.ne.s32.totalorder %s26, %s29
      %p35 = scmp.eq.s32.totalorder %s16, 0
      %p36 = por %p34, %p35
      %p37 = scmp.ne.s32.totalorder %s26, %s29
      %p38 = scmp.eq.s32.totalorder %s21, 1
      %p39 = por %p37, %p38
      %p40 = scmp.ne.s32.totalorder %s29, %s30
      %p41 = scmp.eq.s32.totalorder %s21, 0
      %p42 = por %p40, %p41
      %p43 = scmp.ne.s32.totalorder %s29, %s30
      %p44 = scmp.eq.s32.totalorder %s22, 1
      %p45 = por %p43, %p44
      %p47 = scmp.ne.s32.totalorder %s30, %s46
      %p48 = scmp.eq.s32.totalorder %s22, 0
      %p49 = por %p47, %p48
      %s50 = ssub.s32 %s16, %s23
      %p51 = scmp.eq.s32.totalorder %s50, 0
      %s53 = sadd.s32 %s52, 1
      %s54 = scalar_select %p51, %s52, %s53
      %p57 = pneg %p51
      %p58 = scmp.eq.s32.totalorder %s16, 1
      %p59 = por %p57, %p58
      %p60 = scmp.ne.s32.totalorder %s52, %s55
      %p61 = scmp.eq.s32.totalorder %s16, 0
      %p62 = por %p60, %p61
      %p63 = scmp.ne.s32.totalorder %s52, %s55
      %p64 = scmp.eq.s32.totalorder %s21, 1
      %p65 = por %p63, %p64
      %p66 = scmp.ne.s32.totalorder %s55, %s56
      %p67 = scmp.eq.s32.totalorder %s21, 0
      %p68 = por %p66, %p67
      %p69 = scmp.ne.s32.totalorder %s55, %s56
      %p70 = scmp.eq.s32.totalorder %s22, 1
      %p71 = por %p69, %p70
      %p73 = scmp.ne.s32.totalorder %s56, %s72
      %p74 = scmp.eq.s32.totalorder %s22, 0
      %p75 = por %p73, %p74
      %s77 = sadd.s32 %s76, 1
      %p80 = scmp.eq.s32.totalorder %s16, 1
      %p81 = scmp.ne.s32.totalorder %s76, %s78
      %p82 = scmp.eq.s32.totalorder %s16, 0
      %p83 = por %p81, %p82
      %p84 = scmp.ne.s32.totalorder %s76, %s78
      %p85 = scmp.eq.s32.totalorder %s21, 1
      %p86 = por %p84, %p85
      %p87 = scmp.ne.s32.totalorder %s78, %s79
      %p88 = scmp.eq.s32.totalorder %s21, 0
      %p89 = por %p87, %p88
      %p90 = scmp.ne.s32.totalorder %s78, %s79
      %p91 = scmp.eq.s32.totalorder %s22, 1
      %p92 = por %p90, %p91
      %p94 = scmp.ne.s32.totalorder %s79, %s93
      %p95 = scmp.eq.s32.totalorder %s22, 0
      %p96 = por %p94, %p95
      %s98 = sadd.s32 %s97, 1
      %p101 = scmp.eq.s32.totalorder %s16, 1
      %p102 = scmp.ne.s32.totalorder %s97, %s99
      %p103 = scmp.eq.s32.totalorder %s16, 0
      %p104 = por %p102, %p103
      %p105 = scmp.ne.s32.totalorder %s97, %s99
      %p106 = scmp.eq.s32.totalorder %s21, 1
      %p107 = por %p105, %p106
      %p108 = scmp.ne.s32.totalorder %s99, %s100
      %p109 = scmp.eq.s32.totalorder %s21, 0
      %p110 = por %p108, %p109
      %p111 = scmp.ne.s32.totalorder %s99, %s100
      %p112 = scmp.eq.s32.totalorder %s22, 1
      %p113 = por %p111, %p112
      %p115 = scmp.ne.s32.totalorder %s100, %s114
      %p116 = scmp.eq.s32.totalorder %s22, 0
      %p117 = por %p115, %p116
      %s119 = sadd.s32 %s118, 1
      %p122 = scmp.eq.s32.totalorder %s16, 1
      %p123 = scmp.ne.s32.totalorder %s118, %s120
      %p124 = scmp.eq.s32.totalorder %s16, 0
      %p125 = por %p123, %p124
      %p126 = scmp.ne.s32.totalorder %s118, %s120
      %p127 = scmp.eq.s32.totalorder %s21, 1
      %p128 = por %p126, %p127
      %p129 = scmp.ne.s32.totalorder %s120, %s121
      %p130 = scmp.eq.s32.totalorder %s21, 0
      %p131 = por %p129, %p130
      %p132 = scmp.ne.s32.totalorder %s120, %s121
      %p133 = scmp.eq.s32.totalorder %s22, 1
      %p134 = por %p132, %p133
      %p136 = scmp.ne.s32.totalorder %s121, %s135
      %p137 = scmp.eq.s32.totalorder %s22, 0
      %p138 = por %p136, %p137
      %s140 = sadd.s32 %s139, 1
      %p143 = scmp.eq.s32.totalorder %s16, 1
      %p144 = scmp.ne.s32.totalorder %s139, %s141
      %p145 = scmp.eq.s32.totalorder %s16, 0
      %p146 = por %p144, %p145
      %p147 = scmp.ne.s32.totalorder %s139, %s141
      %p148 = scmp.eq.s32.totalorder %s21, 1
      %p149 = por %p147, %p148
      %p150 = scmp.ne.s32.totalorder %s141, %s142
      %p151 = scmp.eq.s32.totalorder %s21, 0
      %p152 = por %p150, %p151
      %p153 = scmp.ne.s32.totalorder %s141, %s142
      %p154 = scmp.eq.s32.totalorder %s22, 1
      %p155 = por %p153, %p154
      %p157 = scmp.ne.s32.totalorder %s142, %s156
      %p158 = scmp.eq.s32.totalorder %s22, 0
      %p159 = por %p157, %p158
      %s161 = sadd.s32 %s160, 1
      %p164 = scmp.eq.s32.totalorder %s16, 1
      %p165 = scmp.ne.s32.totalorder %s160, %s162
      %p166 = scmp.eq.s32.totalorder %s16, 0
      %p167 = por %p165, %p166
      %p168 = scmp.ne.s32.totalorder %s160, %s162
      %p169 = scmp.eq.s32.totalorder %s21, 1
      %p170 = por %p168, %p169
      %p171 = scmp.ne.s32.totalorder %s162, %s163
      %p172 = scmp.eq.s32.totalorder %s21, 0
      %p173 = por %p171, %p172
      %p174 = scmp.ne.s32.totalorder %s162, %s163
      %p175 = scmp.eq.s32.totalorder %s22, 1
      %p176 = por %p174, %p175
      %p178 = scmp.ne.s32.totalorder %s163, %s177
      %p179 = scmp.eq.s32.totalorder %s22, 0
      %p180 = por %p178, %p179
      %s182 = sadd.s32 %s181, 1
      %p185 = scmp.eq.s32.totalorder %s16, 1
      %p186 = scmp.ne.s32.totalorder %s181, %s183
      %p187 = scmp.eq.s32.totalorder %s16, 0
      %p188 = por %p186, %p187
      %p189 = scmp.ne.s32.totalorder %s181, %s183
      %p190 = scmp.eq.s32.totalorder %s21, 1
      %p191 = por %p189, %p190
      %p192 = scmp.ne.s32.totalorder %s183, %s184
      %p193 = scmp.eq.s32.totalorder %s21, 0
      %p194 = por %p192, %p193
      %p195 = scmp.ne.s32.totalorder %s183, %s184
      %p196 = scmp.eq.s32.totalorder %s22, 1
      %p197 = por %p195, %p196
      %p199 = scmp.ne.s32.totalorder %s184, %s198
      %p200 = scmp.eq.s32.totalorder %s22, 0
      %p201 = por %p199, %p200
      %s203 = sadd.s32 %s202, 1
      %p206 = scmp.eq.s32.totalorder %s16, 1
      %p207 = scmp.ne.s32.totalorder %s202, %s204
      %p208 = scmp.eq.s32.totalorder %s16, 0
      %p209 = por %p207, %p208
      %p210 = scmp.ne.s32.totalorder %s202, %s204
      %p211 = scmp.eq.s32.totalorder %s21, 1
      %p212 = por %p210, %p211
      %p213 = scmp.ne.s32.totalorder %s204, %s205
      %p214 = scmp.eq.s32.totalorder %s21, 0
      %p215 = por %p213, %p214
      %p216 = scmp.ne.s32.totalorder %s204, %s205
      %p217 = scmp.eq.s32.totalorder %s22, 1
      %p218 = por %p216, %p217
      %p220 = scmp.ne.s32.totalorder %s205, %s219
      %p221 = scmp.eq.s32.totalorder %s22, 0
      %p222 = por %p220, %p221
      %s223 = ssub.s32 %s16, %s23
      %p224 = scmp.eq.s32.totalorder %s223, 0
      %s226 = sadd.s32 %s225, 1
      %s227 = scalar_select %p224, %s225, %s226
      %p230 = pneg %p224
      %p231 = scmp.eq.s32.totalorder %s16, 1
      %p232 = por %p230, %p231
      %p233 = scmp.ne.s32.totalorder %s225, %s228
      %p234 = scmp.eq.s32.totalorder %s16, 0
      %p235 = por %p233, %p234
      %p236 = scmp.ne.s32.totalorder %s225, %s228
      %p237 = scmp.eq.s32.totalorder %s21, 1
      %p238 = por %p236, %p237
      %p239 = scmp.ne.s32.totalorder %s228, %s229
      %p240 = scmp.eq.s32.totalorder %s21, 0
      %p241 = por %p239, %p240
      %p242 = scmp.ne.s32.totalorder %s228, %s229
      %p243 = scmp.eq.s32.totalorder %s22, 1
      %p244 = por %p242, %p243
      %p246 = scmp.ne.s32.totalorder %s229, %s245
      %p247 = scmp.eq.s32.totalorder %s22, 0
      %p248 = por %p246, %p247
      %p249 = scmp.le.s32.totalorder 1, %s16
      %p250 = scmp.lt.s32.totalorder %s16, 3
      %p251 = pnand %p249, %p250
      %p252 = pneg %p251
      // Predicated region
      $region9: #{tpu_custom_call.1} parent=5 // pred_check
        _
      $region10: #{tpu_custom_call.1} parent=5 // pred_check_branch
        %254 = sbr.rel (%p251) target = $region12
      $region11: #{tpu_custom_call.1} parent=5 // pred_region
        %s255 = ssub.s32 %s16, 1
        // Predicated region
        $region13: #{tpu_custom_call.1} parent=11 // pred_check
          %p256 = pneg %p89
        $region14: #{tpu_custom_call.1} parent=11 // pred_check_branch
          %258 = sbr.rel (%p256) target = $region16
        $region15: #{tpu_custom_call.1} parent=11 // pred_region
          _
        $region16: #{tpu_custom_call.1} parent=11 // pred_fallthru
          _
        // Predicated region
        $region17: #{tpu_custom_call.1} parent=11 // pred_check
          %p259 = pneg %p110
        $region18: #{tpu_custom_call.1} parent=11 // pred_check_branch
          %261 = sbr.rel (%p259) target = $region20
        $region19: #{tpu_custom_call.1} parent=11 // pred_region
          _
        $region20: #{tpu_custom_call.1} parent=11 // pred_fallthru
          _
        // Predicated region
        $region21: #{tpu_custom_call.1} parent=11 // pred_check
          %p262 = pneg %p131
        $region22: #{tpu_custom_call.1} parent=11 // pred_check_branch
          %264 = sbr.rel (%p262) target = $region24
        $region23: #{tpu_custom_call.1} parent=11 // pred_region
          _
        $region24: #{tpu_custom_call.1} parent=11 // pred_fallthru
          _
        // Predicated region
        $region25: #{tpu_custom_call.1} parent=11 // pred_check
          %p265 = pneg %p152
        $region26: #{tpu_custom_call.1} parent=11 // pred_check_branch
          %267 = sbr.rel (%p265) target = $region28
        $region27: #{tpu_custom_call.1} parent=11 // pred_region
          %s269 = ssub.s32 9600, 9600
          %270 = vsyncadd [#allocation3], %s269
          %s271 = sshll.u32 [#allocation2], 4
          %s272 = int_to_ptr.vmem [resolvable:$true] %s271
          %277 = dma.hbm_to_vmem [thread:$0]  %s5, 9600, %s272, [#allocation3], 192, 192, 12
        $region28: #{tpu_custom_call.1} parent=11 // pred_fallthru
          _
        // Predicated region
        $region29: #{tpu_custom_call.1} parent=11 // pred_check
          %p278 = pneg %p173
        $region30: #{tpu_custom_call.1} parent=11 // pred_check_branch
          %280 = sbr.rel (%p278) target = $region32
        $region31: #{tpu_custom_call.1} parent=11 // pred_region
          _
        $region32: #{tpu_custom_call.1} parent=11 // pred_fallthru
          _
        // Predicated region
        $region33: #{tpu_custom_call.1} parent=11 // pred_check
          %p281 = pneg %p194
        $region34: #{tpu_custom_call.1} parent=11 // pred_check_branch
          %283 = sbr.rel (%p281) target = $region36
        $region35: #{tpu_custom_call.1} parent=11 // pred_region
          _
        $region36: #{tpu_custom_call.1} parent=11 // pred_fallthru
          _
        // Predicated region
        $region37: #{tpu_custom_call.1} parent=11 // pred_check
          %p284 = pneg %p215
        $region38: #{tpu_custom_call.1} parent=11 // pred_check_branch
          %286 = sbr.rel (%p284) target = $region40
        $region39: #{tpu_custom_call.1} parent=11 // pred_region
          _
        $region40: #{tpu_custom_call.1} parent=11 // pred_fallthru
          _
      $region12: #{tpu_custom_call.1} parent=5 // pred_fallthru
        _
      %p287 = scmp.lt.s32.totalorder %s16, 2
      // Predicated region
      $region41: #{tpu_custom_call.1} parent=5 // pred_check
        %p288 = pneg %p287
      $region42: #{tpu_custom_call.1} parent=5 // pred_check_branch
        %290 = sbr.rel (%p288) target = $region44
      $region43: #{tpu_custom_call.1} parent=5 // pred_region
        // Predicated region
        $region45: #{tpu_custom_call.1} parent=43 // pred_check
          %p291 = pneg %p36
        $region46: #{tpu_custom_call.1} parent=43 // pred_check_branch
          %293 = sbr.rel (%p291) target = $region48
        $region47: #{tpu_custom_call.1} parent=43 // pred_region
          %s294 = smul.u32 4, %s16
          %p295 = scmp.lt.s32.totalorder %s294, 7
          %s296 = scalar_select %p295, %s294, 7
          %s297 = smul.addr %s296, 8
          %s298 = scalar_lea.vmem %s0, %s297
          %s299 = smul.u32 4, %s16
        $region48: #{tpu_custom_call.1} parent=43 // pred_fallthru
          _
        // Predicated region
        $region49: #{tpu_custom_call.1} parent=43 // pred_check
          %p300 = pneg %p62
        $region50: #{tpu_custom_call.1} parent=43 // pred_check_branch
          %302 = sbr.rel (%p300) target = $region52
        $region51: #{tpu_custom_call.1} parent=43 // pred_region
          %s303 = smul.u32 4, %s16
          %p304 = scmp.lt.s32.totalorder %s303, 7
          %s305 = scalar_select %p304, %s303, 7
          %s306 = smul.addr %s305, 8
          %s307 = scalar_lea.vmem %s1, %s306
          %s308 = smul.u32 4, %s16
        $region52: #{tpu_custom_call.1} parent=43 // pred_fallthru
          _
      $region44: #{tpu_custom_call.1} parent=5 // pred_fallthru
        _
      %p309 = scmp.le.s32.totalorder 1, %s16
      %p310 = scmp.lt.s32.totalorder %s16, 3
      %p311 = pnand %p309, %p310
      %p312 = pneg %p311
      // Predicated region
      $region53: #{tpu_custom_call.1} parent=5 // pred_check
        _
      $region54: #{tpu_custom_call.1} parent=5 // pred_check_branch
        %314 = sbr.rel (%p311) target = $region56
      $region55: #{tpu_custom_call.1} parent=5 // pred_region
        %s315 = ssub.s32 %s16, 1
        // Predicated region
        $region57: #{tpu_custom_call.1} parent=55 // pred_check
          %p316 = pneg %p152
        $region58: #{tpu_custom_call.1} parent=55 // pred_check_branch
          %318 = sbr.rel (%p316) target = $region60
        $region59: #{tpu_custom_call.1} parent=55 // pred_region
          %319 = dma.done [#allocation3], 9600
        $region60: #{tpu_custom_call.1} parent=55 // pred_fallthru
          _
        %s320 = smul.u32 4, %s21
        %p321 = scmp.lt.s32.totalorder %s320, 7
        %s322 = scalar_select %p321, %s320, 7
        %s323 = smul.addr %s322, 8
        %s324 = scalar_lea.vmem %s0, %s323
        %p325 = pneg %p42
        %p326 = pneg %p39
        %s327 = smul.u32 4, %s21
        %p328 = scmp.lt.s32.totalorder %s327, 7
        %s329 = scalar_select %p328, %s327, 7
        %s330 = smul.addr %s329, 8
        %s331 = scalar_lea.vmem %s1, %s330
        %p332 = pneg %p68
        %p333 = pneg %p65
        %p334 = pneg %p89
        %p335 = pneg %p86
        %p336 = pneg %p110
        %p337 = pneg %p107
        %p338 = pneg %p131
        %p339 = pneg %p128
        %p340 = pneg %p152
        %p341 = pneg %p149
        %p342 = pneg %p173
        %p343 = pneg %p170
        %p344 = pneg %p194
        %p345 = pneg %p191
        %p346 = pneg %p215
        %p347 = pneg %p212
        %p348 = pneg %p241
        %p349 = pneg %p238
        %s350 = smul.u32 4, %s21
        %p351 = scmp.lt.s32.totalorder %s350, 7
        %s352 = scalar_select %p351, %s350, 7
        %s353 = smul.addr %s352, 8
        %s354 = scalar_lea.vmem %s9, %s353
        %s355 = smul.u32 4, %s21
        %p356 = scmp.lt.s32.totalorder %s355, 7
        %s357 = scalar_select %p356, %s355, 7
        %s358 = smul.addr %s357, 8
        %s359 = scalar_lea.vmem %s0, %s358
        %s360 = smul.u32 4, %s21
        %s361 = smul.u32 4, %s21
        %p362 = scmp.lt.s32.totalorder %s361, 7
        %s363 = scalar_select %p362, %s361, 7
        %s364 = smul.addr %s363, 8
        %s365 = scalar_lea.vmem %s1, %s364
        %s366 = smul.u32 4, %s21
        %s367 = smul.u32 4, %s21
        %p368 = scmp.lt.s32.totalorder %s367, 7
        %s369 = scalar_select %p368, %s367, 7
        %s370 = smul.addr %s369, 8
        %s371 = scalar_lea.vmem %s9, %s370
        %s372 = smul.u32 4, %s21
        %v374 = vld [vmem:[%s365] sm:$0xff]
        %v375 = vld [vmem:[%s365 + $0x8] sm:$0xff]
        %v376 = vld [vmem:[%s365 + $0x10] sm:$0xff]
        %v377 = vld [vmem:[%s365 + $0x18] sm:$0xff]
        %v378 = vld [vmem:[%s359] sm:$0xff]
        %v379 = vld [vmem:[%s359 + $0x8] sm:$0xff]
        %v380 = vld [vmem:[%s359 + $0x10] sm:$0xff]
        %v381 = vld [vmem:[%s359 + $0x18] sm:$0xff]
        %v382 = vpack.c.bf16 %v379, %v378
        %v383 = vpack.c.bf16 %v381, %v380
        %v384 = vld [vmem:[%s2] sm:$0xff]
        %v385 = vld [vmem:[%s2 + $0x8] sm:$0xff]
        %v386 = vld [vmem:[%s2 + $0x10] sm:$0xff]
        %v387 = vld [vmem:[%s2 + $0x18] sm:$0xff]
        %v388 = vpack.c.bf16 %v375, %v374
        %v389 = vpack.c.bf16 %v377, %v376
        %v390 = vld [vmem:[%s3] sm:$0xff]
        %v391 = vld [vmem:[%s3 + $0x8] sm:$0xff]
        %v394 = vunpack.c.l.b16 %v390
        %v395 = vunpack.c.h.b16 %v390
        %v396 = vunpack.c.l.b16 %v391
        %v397 = vunpack.c.h.b16 %v391
        %v398 = vpack.c.b16 %v394, %v394
        %v399 = vpack.c.b16 %v395, %v395
        %v400 = vpack.c.b16 %v396, %v396
        %v401 = vpack.c.b16 %v397, %v397
        %vm402 = vcmask 64512
        %v404 = vsel %vm402, %v388, 0
        %v407 = vsel %vm402, %v389, 0
        %vm409 = vcmask 1043456
        %v411 = vsel %vm409, %v398, 0
        %v414 = vsel %vm409, %v399, 0
        %v417 = vsel %vm409, %v400, 0
        %v420 = vsel %vm409, %v401, 0
        %422 = vmatprep.subr.bf16.mxu0 %v414
        %423 = vmatpush1.bf16.msra.mxu0 %v411
        %424 = vmatprep.subr.bf16.mxu0 0
        %425 = vmatpush1.bf16.msra.mxu0 0
        %426 = vmatprep.subr.bf16.mxu0 0
        %427 = vmatpush1.bf16.msra.mxu0 0
        %428 = vmatprep.subr.bf16.mxu0 0
        %429 = vmatpush1.bf16.msra.mxu0 0
        %430 = vmatprep.subr.bf16.mxu0 0
        %431 = vmatpush1.bf16.msra.mxu0 0
        %432 = vmatprep.subr.bf16.mxu0 0
        %433 = vmatpush1.bf16.msra.mxu0 0
        %434 = vmatprep.subr.bf16.mxu0 0
        %435 = vmatpush1.bf16.msra.mxu0 0
        %436 = vmatprep.subr.bf16.mxu0 0
        %437 = vmatpush1.bf16.msra.mxu0 0
        %438 = vmatprep.subr.bf16.mxu0 0
        %439 = vmatpush1.bf16.msra.mxu0 0
        %440 = vmatprep.subr.bf16.mxu0 0
        %441 = vmatpush1.bf16.msra.mxu0 0
        %442 = vmatprep.subr.bf16.mxu0 0
        %443 = vmatpush1.bf16.msra.mxu0 0
        %444 = vmatprep.subr.bf16.mxu0 0
        %445 = vmatpush1.bf16.msra.mxu0 0
        %446 = vmatprep.subr.bf16.mxu0 0
        %447 = vmatpush1.bf16.msra.mxu0 0
        %448 = vmatprep.subr.bf16.mxu0 0
        %449 = vmatpush1.bf16.msra.mxu0 0
        %450 = vmatprep.subr.bf16.mxu0 0
        %451 = vmatpush1.bf16.msra.mxu0 0
        %452 = vmatprep.subr.bf16.mxu0 0
        %453 = vmatpush1.bf16.msra.mxu0 0
        %454 = vmatprep.mubr.bf16.mxu0 0
        %455 = vmatmul.mubr.bf16.gmra.mrb[0].mxu0 %v404
        %v456 = vpop.f32.mrb[0].mxu0
        %v457 = vadd.f32 0.0, %v456
        %v458 = vpop.f32.mrb[0].mxu0
        %v459 = vadd.f32 0.0, %v458
        %v460 = vpop.f32.mrb[0].mxu0
        %v461 = vadd.f32 0.0, %v460
        %v462 = vpop.f32.mrb[0].mxu0
        %v463 = vadd.f32 0.0, %v462
        %464 = vmatprep.mubr.bf16.mxu0 0
        %465 = vmatmul.mubr.bf16.gmra.mrb[0].mxu0 %v407
        %v466 = vpop.f32.mrb[0].mxu0
        %v467 = vadd.f32 0.0, %v466
        %v468 = vpop.f32.mrb[0].mxu0
        %v469 = vadd.f32 0.0, %v468
        %v470 = vpop.f32.mrb[0].mxu0
        %v471 = vadd.f32 0.0, %v470
        %v472 = vpop.f32.mrb[0].mxu0
        %v473 = vadd.f32 0.0, %v472
        %474 = vdwg.mxu0
        %475 = vmatprep.subr.bf16.mxu0 %v420
        %476 = vmatpush1.bf16.msra.mxu0 %v417
        %477 = vmatprep.subr.bf16.mxu0 0
        %478 = vmatpush1.bf16.msra.mxu0 0
        %479 = vmatprep.subr.bf16.mxu0 0
        %480 = vmatpush1.bf16.msra.mxu0 0
        %481 = vmatprep.subr.bf16.mxu0 0
        %482 = vmatpush1.bf16.msra.mxu0 0
        %483 = vmatprep.subr.bf16.mxu0 0
        %484 = vmatpush1.bf16.msra.mxu0 0
        %485 = vmatprep.subr.bf16.mxu0 0
        %486 = vmatpush1.bf16.msra.mxu0 0
        %487 = vmatprep.subr.bf16.mxu0 0
        %488 = vmatpush1.bf16.msra.mxu0 0
        %489 = vmatprep.subr.bf16.mxu0 0
        %490 = vmatpush1.bf16.msra.mxu0 0
        %491 = vmatprep.subr.bf16.mxu0 0
        %492 = vmatpush1.bf16.msra.mxu0 0
        %493 = vmatprep.subr.bf16.mxu0 0
        %494 = vmatpush1.bf16.msra.mxu0 0
        %495 = vmatprep.subr.bf16.mxu0 0
        %496 = vmatpush1.bf16.msra.mxu0 0
        %497 = vmatprep.subr.bf16.mxu0 0
        %498 = vmatpush1.bf16.msra.mxu0 0
        %499 = vmatprep.subr.bf16.mxu0 0
        %500 = vmatpush1.bf16.msra.mxu0 0
        %501 = vmatprep.subr.bf16.mxu0 0
        %502 = vmatpush1.bf16.msra.mxu0 0
        %503 = vmatprep.subr.bf16.mxu0 0
        %504 = vmatpush1.bf16.msra.mxu0 0
        %505 = vmatprep.subr.bf16.mxu0 0
        %506 = vmatpush1.bf16.msra.mxu0 0
        %507 = vmatprep.mubr.bf16.mxu0 0
        %508 = vmatmul.mubr.bf16.gmra.mrb[0].mxu0 %v404
        %v509 = vpop.f32.mrb[0].mxu0
        %v510 = vadd.f32 0.0, %v509
        %v511 = vpop.f32.mrb[0].mxu0
        %v512 = vadd.f32 0.0, %v511
        %v513 = vpop.f32.mrb[0].mxu0
        %v514 = vadd.f32 0.0, %v513
        %v515 = vpop.f32.mrb[0].mxu0
        %v516 = vadd.f32 0.0, %v515
        %517 = vmatprep.mubr.bf16.mxu0 0
        %518 = vmatmul.mubr.bf16.gmra.mrb[0].mxu0 %v407
        %v519 = vpop.f32.mrb[0].mxu0
        %v520 = vadd.f32 0.0, %v519
        %v521 = vpop.f32.mrb[0].mxu0
        %v522 = vadd.f32 0.0, %v521
        %v523 = vpop.f32.mrb[0].mxu0
        %v524 = vadd.f32 0.0, %v523
        %v525 = vpop.f32.mrb[0].mxu0
        %v526 = vadd.f32 0.0, %v525
        %527 = vdwg.mxu0
        %v532 = vunpack.c.l.b16 %v384
        %v533 = vunpack.c.h.b16 %v384
        %v534 = vunpack.c.l.b16 %v385
        %v535 = vunpack.c.h.b16 %v385
        %v536 = vunpack.c.l.b16 %v386
        %v537 = vunpack.c.h.b16 %v386
        %v538 = vunpack.c.l.b16 %v387
        %v539 = vunpack.c.h.b16 %v387
        %v540 = vpack.c.b16 %v536, %v532
        %v541 = vpack.c.b16 %v537, %v533
        %v542 = vpack.c.b16 %v538, %v534
        %v543 = vpack.c.b16 %v539, %v535
        %vm548 = vcmask 130048
        %v550 = vsel %vm548, %v382, 0
        %v553 = vsel %vm548, %v383, 0
        %555 = vmatprep.subr.bf16.mxu0 %v541
        %556 = vmatpush1.bf16.msra.mxu0 %v540
        %557 = vmatprep.subr.bf16.mxu0 0
        %558 = vmatpush1.bf16.msra.mxu0 0
        %559 = vmatprep.subr.bf16.mxu0 0
        %560 = vmatpush1.bf16.msra.mxu0 0
        %561 = vmatprep.subr.bf16.mxu0 0
        %562 = vmatpush1.bf16.msra.mxu0 0
        %563 = vmatprep.subr.bf16.mxu0 0
        %564 = vmatpush1.bf16.msra.mxu0 0
        %565 = vmatprep.subr.bf16.mxu0 0
        %566 = vmatpush1.bf16.msra.mxu0 0
        %567 = vmatprep.subr.bf16.mxu0 0
        %568 = vmatpush1.bf16.msra.mxu0 0
        %569 = vmatprep.subr.bf16.mxu0 0
        %570 = vmatpush1.bf16.msra.mxu0 0
        %571 = vmatprep.subr.bf16.mxu0 0
        %572 = vmatpush1.bf16.msra.mxu0 0
        %573 = vmatprep.subr.bf16.mxu0 0
        %574 = vmatpush1.bf16.msra.mxu0 0
        %575 = vmatprep.subr.bf16.mxu0 0
        %576 = vmatpush1.bf16.msra.mxu0 0
        %577 = vmatprep.subr.bf16.mxu0 0
        %578 = vmatpush1.bf16.msra.mxu0 0
        %579 = vmatprep.subr.bf16.mxu0 0
        %580 = vmatpush1.bf16.msra.mxu0 0
        %581 = vmatprep.subr.bf16.mxu0 0
        %582 = vmatpush1.bf16.msra.mxu0 0
        %583 = vmatprep.subr.bf16.mxu0 0
        %584 = vmatpush1.bf16.msra.mxu0 0
        %585 = vmatprep.subr.bf16.mxu0 0
        %586 = vmatpush1.bf16.msra.mxu0 0
        %587 = vmatprep.mubr.bf16.mxu0 0
        %588 = vmatmul.mubr.bf16.gmra.mrb[0].mxu0 %v550
        %v589 = vpop.f32.mrb[0].mxu0
        %v590 = vadd.f32 %v457, %v589
        %v591 = vpop.f32.mrb[0].mxu0
        %v592 = vadd.f32 %v459, %v591
        %v593 = vpop.f32.mrb[0].mxu0
        %v594 = vadd.f32 %v461, %v593
        %v595 = vpop.f32.mrb[0].mxu0
        %v596 = vadd.f32 %v463, %v595
        %597 = vmatprep.mubr.bf16.mxu0 0
        %598 = vmatmul.mubr.bf16.gmra.mrb[0].mxu0 %v553
        %v599 = vpop.f32.mrb[0].mxu0
        %v600 = vadd.f32 %v467, %v599
        %v601 = vpop.f32.mrb[0].mxu0
        %v602 = vadd.f32 %v469, %v601
        %v603 = vpop.f32.mrb[0].mxu0
        %v604 = vadd.f32 %v471, %v603
        %v605 = vpop.f32.mrb[0].mxu0
        %v606 = vadd.f32 %v473, %v605
        %607 = vdwg.mxu0
        %608 = vmatprep.subr.bf16.mxu0 %v543
        %609 = vmatpush1.bf16.msra.mxu0 %v542
        %610 = vmatprep.subr.bf16.mxu0 0
        %611 = vmatpush1.bf16.msra.mxu0 0
        %612 = vmatprep.subr.bf16.mxu0 0
        %613 = vmatpush1.bf16.msra.mxu0 0
        %614 = vmatprep.subr.bf16.mxu0 0
        %615 = vmatpush1.bf16.msra.mxu0 0
        %616 = vmatprep.subr.bf16.mxu0 0
        %617 = vmatpush1.bf16.msra.mxu0 0
        %618 = vmatprep.subr.bf16.mxu0 0
        %619 = vmatpush1.bf16.msra.mxu0 0
        %620 = vmatprep.subr.bf16.mxu0 0
        %621 = vmatpush1.bf16.msra.mxu0 0
        %622 = vmatprep.subr.bf16.mxu0 0
        %623 = vmatpush1.bf16.msra.mxu0 0
        %624 = vmatprep.subr.bf16.mxu0 0
        %625 = vmatpush1.bf16.msra.mxu0 0
        %626 = vmatprep.subr.bf16.mxu0 0
        %627 = vmatpush1.bf16.msra.mxu0 0
        %628 = vmatprep.subr.bf16.mxu0 0
        %629 = vmatpush1.bf16.msra.mxu0 0
        %630 = vmatprep.subr.bf16.mxu0 0
        %631 = vmatpush1.bf16.msra.mxu0 0
        %632 = vmatprep.subr.bf16.mxu0 0
        %633 = vmatpush1.bf16.msra.mxu0 0
        %634 = vmatprep.subr.bf16.mxu0 0
        %635 = vmatpush1.bf16.msra.mxu0 0
        %636 = vmatprep.subr.bf16.mxu0 0
        %637 = vmatpush1.bf16.msra.mxu0 0
        %638 = vmatprep.subr.bf16.mxu0 0
        %639 = vmatpush1.bf16.msra.mxu0 0
        %640 = vmatprep.mubr.bf16.mxu0 0
        %641 = vmatmul.mubr.bf16.gmra.mrb[0].mxu0 %v550
        %v642 = vpop.f32.mrb[0].mxu0
        %v643 = vadd.f32 %v510, %v642
        %v644 = vpop.f32.mrb[0].mxu0
        %v645 = vadd.f32 %v512, %v644
        %v646 = vpop.f32.mrb[0].mxu0
        %v647 = vadd.f32 %v514, %v646
        %v648 = vpop.f32.mrb[0].mxu0
        %v649 = vadd.f32 %v516, %v648
        %650 = vmatprep.mubr.bf16.mxu0 0
        %651 = vmatmul.mubr.bf16.gmra.mrb[0].mxu0 %v553
        %v652 = vpop.f32.mrb[0].mxu0
        %v653 = vadd.f32 %v520, %v652
        %v654 = vpop.f32.mrb[0].mxu0
        %v655 = vadd.f32 %v522, %v654
        %v656 = vpop.f32.mrb[0].mxu0
        %v657 = vadd.f32 %v524, %v656
        %v658 = vpop.f32.mrb[0].mxu0
        %v659 = vadd.f32 %v526, %v658
        %660 = vdwg.mxu0
        %v661 = vld [vmem:[%s4] sm:$0xf]
        %v663 = vlaneseq
        %v664 = vshrl.u32 %v663, 7
        %v665 = vsub.s32 0, %v664
        %v666 = vrot.slane %v661, %v665
        %v667 = vlaneseq
        %v668 = vshrl.u32 %v667, 7
        %v669 = vsub.s32 1, %v668
        %v670 = vrot.slane %v661, %v669
        %v671 = vlaneseq
        %v672 = vshrl.u32 %v671, 7
        %v673 = vsub.s32 2, %v672
        %v674 = vrot.slane %v661, %v673
        %v675 = vlaneseq
        %v676 = vshrl.u32 %v675, 7
        %v677 = vsub.s32 3, %v676
        %v678 = vrot.slane %v661, %v677
        %v683 = vadd.f32 %v590, %v666
        %v684 = vadd.f32 %v592, %v670
        %v685 = vadd.f32 %v643, %v674
        %v686 = vadd.f32 %v645, %v678
        %v687 = vadd.f32 %v594, %v666
        %v688 = vadd.f32 %v596, %v670
        %v689 = vadd.f32 %v647, %v674
        %v690 = vadd.f32 %v649, %v678
        %v691 = vadd.f32 %v600, %v666
        %v692 = vadd.f32 %v602, %v670
        %v693 = vadd.f32 %v653, %v674
        %v694 = vadd.f32 %v655, %v678
        %v695 = vadd.f32 %v604, %v666
        %v696 = vadd.f32 %v606, %v670
        %v697 = vadd.f32 %v657, %v674
        %v698 = vadd.f32 %v659, %v678
        %v699 = vmax.f32 %v683, 0.0
        %v700 = vmax.f32 %v684, 0.0
        %v701 = vmax.f32 %v685, 0.0
        %v702 = vmax.f32 %v686, 0.0
        %v703 = vmax.f32 %v687, 0.0
        %v704 = vmax.f32 %v688, 0.0
        %v705 = vmax.f32 %v689, 0.0
        %v706 = vmax.f32 %v690, 0.0
        %v707 = vmax.f32 %v691, 0.0
        %v708 = vmax.f32 %v692, 0.0
        %v709 = vmax.f32 %v693, 0.0
        %v710 = vmax.f32 %v694, 0.0
        %v711 = vmax.f32 %v695, 0.0
        %v712 = vmax.f32 %v696, 0.0
        %v713 = vmax.f32 %v697, 0.0
        %v714 = vmax.f32 %v698, 0.0
        %v715 = vpack.c.bf16 %v703, %v699
        %v716 = vpack.c.bf16 %v704, %v700
        %v717 = vpack.c.bf16 %v705, %v701
        %v718 = vpack.c.bf16 %v706, %v702
        %v719 = vpack.c.bf16 %v711, %v707
        %v720 = vpack.c.bf16 %v712, %v708
        %v721 = vpack.c.bf16 %v713, %v709
        %v722 = vpack.c.bf16 %v714, %v710
        %v723 = vld [vmem:[#allocation2] sm:$0xff]
        %v724 = vld [vmem:[#allocation2 + $0x8] sm:$0xf]
        %v725 = vld [vmem:[#allocation2 + $0xc] sm:$0xff]
        %v726 = vld [vmem:[#allocation2 + $0x14] sm:$0xf]
        %v727 = vld [vmem:[#allocation2 + $0x18] sm:$0xff]
        %v728 = vld [vmem:[#allocation2 + $0x20] sm:$0xf]
        %v729 = vld [vmem:[#allocation2 + $0x24] sm:$0xff]
        %v730 = vld [vmem:[#allocation2 + $0x2c] sm:$0xf]
        %v731 = vld [vmem:[#allocation2 + $0x30] sm:$0xff]
        %v732 = vld [vmem:[#allocation2 + $0x38] sm:$0xf]
        %v733 = vld [vmem:[#allocation2 + $0x3c] sm:$0xff]
        %v734 = vld [vmem:[#allocation2 + $0x44] sm:$0xf]
        %v735 = vld [vmem:[#allocation2 + $0x48] sm:$0xff]
        %v736 = vld [vmem:[#allocation2 + $0x50] sm:$0xf]
        %v737 = vld [vmem:[#allocation2 + $0x54] sm:$0xff]
        %v738 = vld [vmem:[#allocation2 + $0x5c] sm:$0xf]
        %v739 = vld [vmem:[#allocation2 + $0x60] sm:$0xff]
        %v740 = vld [vmem:[#allocation2 + $0x68] sm:$0xf]
        %v741 = vld [vmem:[#allocation2 + $0x6c] sm:$0xff]
        %v742 = vld [vmem:[#allocation2 + $0x74] sm:$0xf]
        %v743 = vld [vmem:[#allocation2 + $0x78] sm:$0xff]
        %v744 = vld [vmem:[#allocation2 + $0x80] sm:$0xf]
        %v745 = vld [vmem:[#allocation2 + $0x84] sm:$0xff]
        %v746 = vld [vmem:[#allocation2 + $0x8c] sm:$0xf]
        %v747 = vld [vmem:[#allocation2 + $0x90] sm:$0xff]
        %v748 = vld [vmem:[#allocation2 + $0x98] sm:$0xf]
        %v749 = vld [vmem:[#allocation2 + $0x9c] sm:$0xff]
        %v750 = vld [vmem:[#allocation2 + $0xa4] sm:$0xf]
        %v751 = vld [vmem:[#allocation2 + $0xa8] sm:$0xff]
        %v752 = vld [vmem:[#allocation2 + $0xb0] sm:$0xf]
        %v753 = vld [vmem:[#allocation2 + $0xb4] sm:$0xff]
        %v754 = vld [vmem:[#allocation2 + $0xbc] sm:$0xf]
        %v755 = vld [vmem:[#allocation2 + $0xc0] sm:$0xff]
        %v756 = vld [vmem:[#allocation2 + $0xc8] sm:$0xf]
        %v757 = vld [vmem:[#allocation2 + $0xcc] sm:$0xff]
        %v758 = vld [vmem:[#allocation2 + $0xd4] sm:$0xf]
        %v759 = vld [vmem:[#allocation2 + $0xd8] sm:$0xff]
        %v760 = vld [vmem:[#allocation2 + $0xe0] sm:$0xf]
        %v761 = vld [vmem:[#allocation2 + $0xe4] sm:$0xff]
        %v762 = vld [vmem:[#allocation2 + $0xec] sm:$0xf]
        %v763 = vld [vmem:[#allocation2 + $0xf0] sm:$0xff]
        %v764 = vld [vmem:[#allocation2 + $0xf8] sm:$0xf]
        %v765 = vld [vmem:[#allocation2 + $0xfc] sm:$0xff]
        %v766 = vld [vmem:[#allocation2 + $0x104] sm:$0xf]
        %v767 = vld [vmem:[#allocation2 + $0x108] sm:$0xff]
        %v768 = vld [vmem:[#allocation2 + $0x110] sm:$0xf]
        %v769 = vld [vmem:[#allocation2 + $0x114] sm:$0xff]
        %v770 = vld [vmem:[#allocation2 + $0x11c] sm:$0xf]
        %v771 = vld [vmem:[#allocation2 + $0x120] sm:$0xff]
        %v772 = vld [vmem:[#allocation2 + $0x128] sm:$0xf]
        %v773 = vld [vmem:[#allocation2 + $0x12c] sm:$0xff]
        %v774 = vld [vmem:[#allocation2 + $0x134] sm:$0xf]
        %v775 = vld [vmem:[#allocation2 + $0x138] sm:$0xff]
        %v776 = vld [vmem:[#allocation2 + $0x140] sm:$0xf]
        %v777 = vld [vmem:[#allocation2 + $0x144] sm:$0xff]
        %v778 = vld [vmem:[#allocation2 + $0x14c] sm:$0xf]
        %v779 = vld [vmem:[#allocation2 + $0x150] sm:$0xff]
        %v780 = vld [vmem:[#allocation2 + $0x158] sm:$0xf]
        %v781 = vld [vmem:[#allocation2 + $0x15c] sm:$0xff]
        %v782 = vld [vmem:[#allocation2 + $0x164] sm:$0xf]
        %v783 = vld [vmem:[#allocation2 + $0x168] sm:$0xff]
        %v784 = vld [vmem:[#allocation2 + $0x170] sm:$0xf]
        %v785 = vld [vmem:[#allocation2 + $0x174] sm:$0xff]
        %v786 = vld [vmem:[#allocation2 + $0x17c] sm:$0xf]
        %v787 = vld [vmem:[#allocation2 + $0x180] sm:$0xff]
        %v788 = vld [vmem:[#allocation2 + $0x188] sm:$0xf]
        %v789 = vld [vmem:[#allocation2 + $0x18c] sm:$0xff]
        %v790 = vld [vmem:[#allocation2 + $0x194] sm:$0xf]
        %v791 = vld [vmem:[#allocation2 + $0x198] sm:$0xff]
        %v792 = vld [vmem:[#allocation2 + $0x1a0] sm:$0xf]
        %v793 = vld [vmem:[#allocation2 + $0x1a4] sm:$0xff]
        %v794 = vld [vmem:[#allocation2 + $0x1ac] sm:$0xf]
        %v795 = vld [vmem:[#allocation2 + $0x1b0] sm:$0xff]
        %v796 = vld [vmem:[#allocation2 + $0x1b8] sm:$0xf]
        %v797 = vld [vmem:[#allocation2 + $0x1bc] sm:$0xff]
        %v798 = vld [vmem:[#allocation2 + $0x1c4] sm:$0xf]
        %v799 = vld [vmem:[#allocation2 + $0x1c8] sm:$0xff]
        %v800 = vld [vmem:[#allocation2 + $0x1d0] sm:$0xf]
        %v801 = vld [vmem:[#allocation2 + $0x1d4] sm:$0xff]
        %v802 = vld [vmem:[#allocation2 + $0x1dc] sm:$0xf]
        %v803 = vld [vmem:[#allocation2 + $0x1e0] sm:$0xff]
        %v804 = vld [vmem:[#allocation2 + $0x1e8] sm:$0xf]
        %v805 = vld [vmem:[#allocation2 + $0x1ec] sm:$0xff]
        %v806 = vld [vmem:[#allocation2 + $0x1f4] sm:$0xf]
        %v807 = vld [vmem:[#allocation2 + $0x1f8] sm:$0xff]
        %v808 = vld [vmem:[#allocation2 + $0x200] sm:$0xf]
        %v809 = vld [vmem:[#allocation2 + $0x204] sm:$0xff]
        %v810 = vld [vmem:[#allocation2 + $0x20c] sm:$0xf]
        %v811 = vld [vmem:[#allocation2 + $0x210] sm:$0xff]
        %v812 = vld [vmem:[#allocation2 + $0x218] sm:$0xf]
        %v813 = vld [vmem:[#allocation2 + $0x21c] sm:$0xff]
        %v814 = vld [vmem:[#allocation2 + $0x224] sm:$0xf]
        %v815 = vld [vmem:[#allocation2 + $0x228] sm:$0xff]
        %v816 = vld [vmem:[#allocation2 + $0x230] sm:$0xf]
        %v817 = vld [vmem:[#allocation2 + $0x234] sm:$0xff]
        %v818 = vld [vmem:[#allocation2 + $0x23c] sm:$0xf]
        %v819 = vld [vmem:[#allocation2 + $0x240] sm:$0xff]
        %v820 = vld [vmem:[#allocation2 + $0x248] sm:$0xf]
        %v821 = vld [vmem:[#allocation2 + $0x24c] sm:$0xff]
        %v822 = vld [vmem:[#allocation2 + $0x254] sm:$0xf]
        %v823 = vld [vmem:[%s6] sm:$0x7]
        %v825 = vlaneseq
        %v826 = vshrl.u32 %v825, 7
        %v827 = vsub.s32 0, %v826
        %v828 = vrot.slane %v823, %v827
        %v829 = vlaneseq
        %v830 = vshrl.u32 %v829, 7
        %v831 = vsub.s32 1, %v830
        %v832 = vrot.slane %v823, %v831
        %v833 = vlaneseq
        %v834 = vshrl.u32 %v833, 7
        %v835 = vsub.s32 2, %v834
        %v836 = vrot.slane %v823, %v835
        %v940 = vunpack.c.l.b16 %v723
        %v941 = vunpack.c.h.b16 %v723
        %v942 = vunpack.c.l.b16 %v724
        %v943 = vunpack.c.l.b16 %v725
        %v944 = vunpack.c.h.b16 %v725
        %v945 = vunpack.c.l.b16 %v726
        %v946 = vunpack.c.l.b16 %v727
        %v947 = vunpack.c.h.b16 %v727
        %v948 = vunpack.c.l.b16 %v728
        %v949 = vunpack.c.l.b16 %v729
        %v950 = vunpack.c.h.b16 %v729
        %v951 = vunpack.c.l.b16 %v730
        %v952 = vunpack.c.l.b16 %v731
        %v953 = vunpack.c.h.b16 %v731
        %v954 = vunpack.c.l.b16 %v732
        %v955 = vunpack.c.l.b16 %v733
        %v956 = vunpack.c.h.b16 %v733
        %v957 = vunpack.c.l.b16 %v734
        %v958 = vunpack.c.l.b16 %v735
        %v959 = vunpack.c.h.b16 %v735
        %v960 = vunpack.c.l.b16 %v736
        %v961 = vunpack.c.l.b16 %v737
        %v962 = vunpack.c.h.b16 %v737
        %v963 = vunpack.c.l.b16 %v738
        %v964 = vunpack.c.l.b16 %v739
        %v965 = vunpack.c.h.b16 %v739
        %v966 = vunpack.c.l.b16 %v740
        %v967 = vunpack.c.l.b16 %v741
        %v968 = vunpack.c.h.b16 %v741
        %v969 = vunpack.c.l.b16 %v742
        %v970 = vunpack.c.l.b16 %v743
        %v971 = vunpack.c.h.b16 %v743
        %v972 = vunpack.c.l.b16 %v744
        %v973 = vunpack.c.l.b16 %v745
        %v974 = vunpack.c.h.b16 %v745
        %v975 = vunpack.c.l.b16 %v746
        %v976 = vunpack.c.l.b16 %v747
        %v977 = vunpack.c.h.b16 %v747
        %v978 = vunpack.c.l.b16 %v748
        %v979 = vunpack.c.l.b16 %v749
        %v980 = vunpack.c.h.b16 %v749
        %v981 = vunpack.c.l.b16 %v750
        %v982 = vunpack.c.l.b16 %v751
        %v983 = vunpack.c.h.b16 %v751
        %v984 = vunpack.c.l.b16 %v752
        %v985 = vunpack.c.l.b16 %v753
        %v986 = vunpack.c.h.b16 %v753
        %v987 = vunpack.c.l.b16 %v754
        %v988 = vunpack.c.l.b16 %v755
        %v989 = vunpack.c.h.b16 %v755
        %v990 = vunpack.c.l.b16 %v756
        %v991 = vunpack.c.l.b16 %v757
        %v992 = vunpack.c.h.b16 %v757
        %v993 = vunpack.c.l.b16 %v758
        %v994 = vunpack.c.l.b16 %v759
        %v995 = vunpack.c.h.b16 %v759
        %v996 = vunpack.c.l.b16 %v760
        %v997 = vunpack.c.l.b16 %v761
        %v998 = vunpack.c.h.b16 %v761
        %v999 = vunpack.c.l.b16 %v762
        %v1000 = vunpack.c.l.b16 %v763
        %v1001 = vunpack.c.h.b16 %v763
        %v1002 = vunpack.c.l.b16 %v764
        %v1003 = vunpack.c.l.b16 %v765
        %v1004 = vunpack.c.h.b16 %v765
        %v1005 = vunpack.c.l.b16 %v766
        %v1006 = vunpack.c.l.b16 %v767
        %v1007 = vunpack.c.h.b16 %v767
        %v1008 = vunpack.c.l.b16 %v768
        %v1009 = vunpack.c.l.b16 %v769
        %v1010 = vunpack.c.h.b16 %v769
        %v1011 = vunpack.c.l.b16 %v770
        %v1012 = vunpack.c.l.b16 %v771
        %v1013 = vunpack.c.h.b16 %v771
        %v1014 = vunpack.c.l.b16 %v772
        %v1015 = vunpack.c.l.b16 %v773
        %v1016 = vunpack.c.h.b16 %v773
        %v1017 = vunpack.c.l.b16 %v774
        %v1018 = vunpack.c.l.b16 %v775
        %v1019 = vunpack.c.h.b16 %v775
        %v1020 = vunpack.c.l.b16 %v776
        %v1021 = vunpack.c.l.b16 %v777
        %v1022 = vunpack.c.h.b16 %v777
        %v1023 = vunpack.c.l.b16 %v778
        %v1024 = vunpack.c.l.b16 %v779
        %v1025 = vunpack.c.h.b16 %v779
        %v1026 = vunpack.c.l.b16 %v780
        %v1027 = vunpack.c.l.b16 %v781
        %v1028 = vunpack.c.h.b16 %v781
        %v1029 = vunpack.c.l.b16 %v782
        %v1030 = vunpack.c.l.b16 %v783
        %v1031 = vunpack.c.h.b16 %v783
        %v1032 = vunpack.c.l.b16 %v784
        %v1033 = vunpack.c.l.b16 %v785
        %v1034 = vunpack.c.h.b16 %v785
        %v1035 = vunpack.c.l.b16 %v786
        %v1036 = vunpack.c.l.b16 %v787
        %v1037 = vunpack.c.h.b16 %v787
        %v1038 = vunpack.c.l.b16 %v788
        %v1039 = vunpack.c.l.b16 %v789
        %v1040 = vunpack.c.h.b16 %v789
        %v1041 = vunpack.c.l.b16 %v790
        %v1042 = vunpack.c.l.b16 %v791
        %v1043 = vunpack.c.h.b16 %v791
        %v1044 = vunpack.c.l.b16 %v792
        %v1045 = vunpack.c.l.b16 %v793
        %v1046 = vunpack.c.h.b16 %v793
        %v1047 = vunpack.c.l.b16 %v794
        %v1048 = vunpack.c.l.b16 %v795
        %v1049 = vunpack.c.h.b16 %v795
        %v1050 = vunpack.c.l.b16 %v796
        %v1051 = vunpack.c.l.b16 %v797
        %v1052 = vunpack.c.h.b16 %v797
        %v1053 = vunpack.c.l.b16 %v798
        %v1054 = vunpack.c.l.b16 %v799
        %v1055 = vunpack.c.h.b16 %v799
        %v1056 = vunpack.c.l.b16 %v800
        %v1057 = vunpack.c.l.b16 %v801
        %v1058 = vunpack.c.h.b16 %v801
        %v1059 = vunpack.c.l.b16 %v802
        %v1060 = vunpack.c.l.b16 %v803
        %v1061 = vunpack.c.h.b16 %v803
        %v1062 = vunpack.c.l.b16 %v804
        %v1063 = vunpack.c.l.b16 %v805
        %v1064 = vunpack.c.h.b16 %v805
        %v1065 = vunpack.c.l.b16 %v806
        %v1066 = vunpack.c.l.b16 %v807
        %v1067 = vunpack.c.h.b16 %v807
        %v1068 = vunpack.c.l.b16 %v808
        %v1069 = vunpack.c.l.b16 %v809
        %v1070 = vunpack.c.h.b16 %v809
        %v1071 = vunpack.c.l.b16 %v810
        %v1072 = vunpack.c.l.b16 %v811
        %v1073 = vunpack.c.h.b16 %v811
        %v1074 = vunpack.c.l.b16 %v812
        %v1075 = vunpack.c.l.b16 %v813
        %v1076 = vunpack.c.h.b16 %v813
        %v1077 = vunpack.c.l.b16 %v814
        %v1078 = vunpack.c.l.b16 %v815
        %v1079 = vunpack.c.h.b16 %v815
        %v1080 = vunpack.c.l.b16 %v816
        %v1081 = vunpack.c.l.b16 %v817
        %v1082 = vunpack.c.h.b16 %v817
        %v1083 = vunpack.c.l.b16 %v818
        %v1084 = vunpack.c.l.b16 %v819
        %v1085 = vunpack.c.h.b16 %v819
        %v1086 = vunpack.c.l.b16 %v820
        %v1087 = vunpack.c.l.b16 %v821
        %v1088 = vunpack.c.h.b16 %v821
        %v1089 = vunpack.c.l.b16 %v822
        %v1090 = vpack.c.b16 %v943, %v940
        %v1091 = vpack.c.b16 %v944, %v941
        %v1092 = vpack.c.b16 %v945, %v942
        %v1093 = vpack.c.b16 %v949, %v946
        %v1094 = vpack.c.b16 %v950, %v947
        %v1095 = vpack.c.b16 %v951, %v948
        %v1096 = vpack.c.b16 %v955, %v952
        %v1097 = vpack.c.b16 %v956, %v953
        %v1098 = vpack.c.b16 %v957, %v954
        %v1099 = vpack.c.b16 %v961, %v958
        %v1100 = vpack.c.b16 %v962, %v959
        %v1101 = vpack.c.b16 %v963, %v960
        %v1102 = vpack.c.b16 %v967, %v964
        %v1103 = vpack.c.b16 %v968, %v965
        %v1104 = vpack.c.b16 %v969, %v966
        %v1105 = vpack.c.b16 %v973, %v970
        %v1106 = vpack.c.b16 %v974, %v971
        %v1107 = vpack.c.b16 %v975, %v972
        %v1108 = vpack.c.b16 %v979, %v976
        %v1109 = vpack.c.b16 %v980, %v977
        %v1110 = vpack.c.b16 %v981, %v978
        %v1111 = vpack.c.b16 %v985, %v982
        %v1112 = vpack.c.b16 %v986, %v983
        %v1113 = vpack.c.b16 %v987, %v984
        %v1114 = vpack.c.b16 %v991, %v988
        %v1115 = vpack.c.b16 %v992, %v989
        %v1116 = vpack.c.b16 %v993, %v990
        %v1117 = vpack.c.b16 %v997, %v994
        %v1118 = vpack.c.b16 %v998, %v995
        %v1119 = vpack.c.b16 %v999, %v996
        %v1120 = vpack.c.b16 %v1003, %v1000
        %v1121 = vpack.c.b16 %v1004, %v1001
        %v1122 = vpack.c.b16 %v1005, %v1002
        %v1123 = vpack.c.b16 %v1009, %v1006
        %v1124 = vpack.c.b16 %v1010, %v1007
        %v1125 = vpack.c.b16 %v1011, %v1008
        %v1126 = vpack.c.b16 %v1015, %v1012
        %v1127 = vpack.c.b16 %v1016, %v1013
        %v1128 = vpack.c.b16 %v1017, %v1014
        %v1129 = vpack.c.b16 %v1021, %v1018
        %v1130 = vpack.c.b16 %v1022, %v1019
        %v1131 = vpack.c.b16 %v1023, %v1020
        %v1132 = vpack.c.b16 %v1027, %v1024
        %v1133 = vpack.c.b16 %v1028, %v1025
        %v1134 = vpack.c.b16 %v1029, %v1026
        %v1135 = vpack.c.b16 %v1033, %v1030
        %v1136 = vpack.c.b16 %v1034, %v1031
        %v1137 = vpack.c.b16 %v1035, %v1032
        %v1138 = vpack.c.b16 %v1039, %v1036
        %v1139 = vpack.c.b16 %v1040, %v1037
        %v1140 = vpack.c.b16 %v1041, %v1038
        %v1141 = vpack.c.b16 %v1045, %v1042
        %v1142 = vpack.c.b16 %v1046, %v1043
        %v1143 = vpack.c.b16 %v1047, %v1044
        %v1144 = vpack.c.b16 %v1051, %v1048
        %v1145 = vpack.c.b16 %v1052, %v1049
        %v1146 = vpack.c.b16 %v1053, %v1050
        %v1147 = vpack.c.b16 %v1057, %v1054
        %v1148 = vpack.c.b16 %v1058, %v1055
        %v1149 = vpack.c.b16 %v1059, %v1056
        %v1150 = vpack.c.b16 %v1063, %v1060
        %v1151 = vpack.c.b16 %v1064, %v1061
        %v1152 = vpack.c.b16 %v1065, %v1062
        %v1153 = vpack.c.b16 %v1069, %v1066
        %v1154 = vpack.c.b16 %v1070, %v1067
        %v1155 = vpack.c.b16 %v1071, %v1068
        %v1156 = vpack.c.b16 %v1075, %v1072
        %v1157 = vpack.c.b16 %v1076, %v1073
        %v1158 = vpack.c.b16 %v1077, %v1074
        %v1159 = vpack.c.b16 %v1081, %v1078
        %v1160 = vpack.c.b16 %v1082, %v1079
        %v1161 = vpack.c.b16 %v1083, %v1080
        %v1162 = vpack.c.b16 %v1087, %v1084
        %v1163 = vpack.c.b16 %v1088, %v1085
        %v1164 = vpack.c.b16 %v1089, %v1086
        %v1241 = vsel %vm548, %v718, 0
        %v1244 = vsel %vm548, %v722, 0
        %1246 = vmatprep.subr.bf16.mxu0 %v1091
        %1247 = vmatpush1.bf16.msra.mxu0 %v1090
        %1248 = vmatprep.subr.bf16.mxu0 %v1094
        %1249 = vmatpush1.bf16.msra.mxu0 %v1093
        %1250 = vmatprep.subr.bf16.mxu0 %v1097
        %1251 = vmatpush1.bf16.msra.mxu0 %v1096
        %1252 = vmatprep.subr.bf16.mxu0 %v1100
        %1253 = vmatpush1.bf16.msra.mxu0 %v1099
        %1254 = vmatprep.subr.bf16.mxu0 %v1103
        %1255 = vmatpush1.bf16.msra.mxu0 %v1102
        %1256 = vmatprep.subr.bf16.mxu0 %v1106
        %1257 = vmatpush1.bf16.msra.mxu0 %v1105
        %1258 = vmatprep.subr.bf16.mxu0 %v1109
        %1259 = vmatpush1.bf16.msra.mxu0 %v1108
        %1260 = vmatprep.subr.bf16.mxu0 %v1112
        %1261 = vmatpush1.bf16.msra.mxu0 %v1111
        %1262 = vmatprep.subr.bf16.mxu0 %v1115
        %1263 = vmatpush1.bf16.msra.mxu0 %v1114
        %1264 = vmatprep.subr.bf16.mxu0 %v1118
        %1265 = vmatpush1.bf16.msra.mxu0 %v1117
        %1266 = vmatprep.subr.bf16.mxu0 %v1121
        %1267 = vmatpush1.bf16.msra.mxu0 %v1120
        %1268 = vmatprep.subr.bf16.mxu0 %v1124
        %1269 = vmatpush1.bf16.msra.mxu0 %v1123
        %1270 = vmatprep.subr.bf16.mxu0 %v1127
        %1271 = vmatpush1.bf16.msra.mxu0 %v1126
        %1272 = vmatprep.subr.bf16.mxu0 %v1130
        %1273 = vmatpush1.bf16.msra.mxu0 %v1129
        %1274 = vmatprep.subr.bf16.mxu0 %v1133
        %1275 = vmatpush1.bf16.msra.mxu0 %v1132
        %1276 = vmatprep.subr.bf16.mxu0 %v1136
        %1277 = vmatpush1.bf16.msra.mxu0 %v1135
        %1278 = vmatprep.mubr.bf16.mxu0 %v716
        %1279 = vmatmul.mubr.bf16.gmra.mrb[0].mxu0 %v715
        %v1280 = vpop.f32.mrb[0].mxu0
        %v1281 = vadd.f32 %v828, %v1280
        %v1282 = vpop.f32.mrb[0].mxu0
        %v1283 = vadd.f32 %v832, %v1282
        %v1284 = vpop.f32.mrb[0].mxu0
        %v1285 = vadd.f32 %v828, %v1284
        %v1286 = vpop.f32.mrb[0].mxu0
        %v1287 = vadd.f32 %v832, %v1286
        %1288 = vmatprep.mubr.bf16.mxu0 %v720
        %1289 = vmatmul.mubr.bf16.gmra.mrb[0].mxu0 %v719
        %v1290 = vpop.f32.mrb[0].mxu0
        %v1291 = vadd.f32 %v828, %v1290
        %v1292 = vpop.f32.mrb[0].mxu0
        %v1293 = vadd.f32 %v832, %v1292
        %v1294 = vpop.f32.mrb[0].mxu0
        %v1295 = vadd.f32 %v828, %v1294
        %v1296 = vpop.f32.mrb[0].mxu0
        %v1297 = vadd.f32 %v832, %v1296
        %1298 = vdwg.mxu0
        %1299 = vmatprep.subr.bf16.mxu0 %v1139
        %1300 = vmatpush1.bf16.msra.mxu0 %v1138
        %1301 = vmatprep.subr.bf16.mxu0 %v1142
        %1302 = vmatpush1.bf16.msra.mxu0 %v1141
        %1303 = vmatprep.subr.bf16.mxu0 %v1145
        %1304 = vmatpush1.bf16.msra.mxu0 %v1144
        %1305 = vmatprep.subr.bf16.mxu0 %v1148
        %1306 = vmatpush1.bf16.msra.mxu0 %v1147
        %1307 = vmatprep.subr.bf16.mxu0 %v1151
        %1308 = vmatpush1.bf16.msra.mxu0 %v1150
        %1309 = vmatprep.subr.bf16.mxu0 %v1154
        %1310 = vmatpush1.bf16.msra.mxu0 %v1153
        %1311 = vmatprep.subr.bf16.mxu0 %v1157
        %1312 = vmatpush1.bf16.msra.mxu0 %v1156
        %1313 = vmatprep.subr.bf16.mxu0 %v1160
        %1314 = vmatpush1.bf16.msra.mxu0 %v1159
        %1315 = vmatprep.subr.bf16.mxu0 %v1163
        %1316 = vmatpush1.bf16.msra.mxu0 %v1162
        %1317 = vmatprep.subr.bf16.mxu0 0
        %1318 = vmatpush1.bf16.msra.mxu0 0
        %1319 = vmatprep.subr.bf16.mxu0 0
        %1320 = vmatpush1.bf16.msra.mxu0 0
        %1321 = vmatprep.subr.bf16.mxu0 0
        %1322 = vmatpush1.bf16.msra.mxu0 0
        %1323 = vmatprep.subr.bf16.mxu0 0
        %1324 = vmatpush1.bf16.msra.mxu0 0
        %1325 = vmatprep.subr.bf16.mxu0 0
        %1326 = vmatpush1.bf16.msra.mxu0 0
        %1327 = vmatprep.subr.bf16.mxu0 0
        %1328 = vmatpush1.bf16.msra.mxu0 0
        %1329 = vmatprep.subr.bf16.mxu0 0
        %1330 = vmatpush1.bf16.msra.mxu0 0
        %1331 = vmatprep.mubr.bf16.mxu0 %v1241
        %1332 = vmatmul.mubr.bf16.gmra.mrb[0].mxu0 %v717
        %v1333 = vpop.f32.mrb[0].mxu0
        %v1334 = vadd.f32 %v1281, %v1333
        %v1335 = vpop.f32.mrb[0].mxu0
        %v1336 = vadd.f32 %v1283, %v1335
        %v1337 = vpop.f32.mrb[0].mxu0
        %v1338 = vadd.f32 %v1285, %v1337
        %v1339 = vpop.f32.mrb[0].mxu0
        %v1340 = vadd.f32 %v1287, %v1339
        %1341 = vmatprep.mubr.bf16.mxu0 %v1244
        %1342 = vmatmul.mubr.bf16.gmra.mrb[0].mxu0 %v721
        %v1343 = vpop.f32.mrb[0].mxu0
        %v1344 = vadd.f32 %v1291, %v1343
        %v1345 = vpop.f32.mrb[0].mxu0
        %v1346 = vadd.f32 %v1293, %v1345
        %v1347 = vpop.f32.mrb[0].mxu0
        %v1348 = vadd.f32 %v1295, %v1347
        %v1349 = vpop.f32.mrb[0].mxu0
        %v1350 = vadd.f32 %v1297, %v1349
        %1351 = vdwg.mxu0
        %1352 = vmatprep.subr.bf16.mxu0 0
        %1353 = vmatpush1.bf16.msra.mxu0 %v1092
        %1354 = vmatprep.subr.bf16.mxu0 0
        %1355 = vmatpush1.bf16.msra.mxu0 %v1095
        %1356 = vmatprep.subr.bf16.mxu0 0
        %1357 = vmatpush1.bf16.msra.mxu0 %v1098
        %1358 = vmatprep.subr.bf16.mxu0 0
        %1359 = vmatpush1.bf16.msra.mxu0 %v1101
        %1360 = vmatprep.subr.bf16.mxu0 0
        %1361 = vmatpush1.bf16.msra.mxu0 %v1104
        %1362 = vmatprep.subr.bf16.mxu0 0
        %1363 = vmatpush1.bf16.msra.mxu0 %v1107
        %1364 = vmatprep.subr.bf16.mxu0 0
        %1365 = vmatpush1.bf16.msra.mxu0 %v1110
        %1366 = vmatprep.subr.bf16.mxu0 0
        %1367 = vmatpush1.bf16.msra.mxu0 %v1113
        %1368 = vmatprep.subr.bf16.mxu0 0
        %1369 = vmatpush1.bf16.msra.mxu0 %v1116
        %1370 = vmatprep.subr.bf16.mxu0 0
        %1371 = vmatpush1.bf16.msra.mxu0 %v1119
        %1372 = vmatprep.subr.bf16.mxu0 0
        %1373 = vmatpush1.bf16.msra.mxu0 %v1122
        %1374 = vmatprep.subr.bf16.mxu0 0
        %1375 = vmatpush1.bf16.msra.mxu0 %v1125
        %1376 = vmatprep.subr.bf16.mxu0 0
        %1377 = vmatpush1.bf16.msra.mxu0 %v1128
        %1378 = vmatprep.subr.bf16.mxu0 0
        %1379 = vmatpush1.bf16.msra.mxu0 %v1131
        %1380 = vmatprep.subr.bf16.mxu0 0
        %1381 = vmatpush1.bf16.msra.mxu0 %v1134
        %1382 = vmatprep.subr.bf16.mxu0 0
        %1383 = vmatpush1.bf16.msra.mxu0 %v1137
        %1384 = vmatprep.mubr.bf16.mxu0 %v716
        %1385 = vmatmul.mubr.bf16.gmra.mrb[0].mxu0 %v715
        %v1386 = vpop.f32.mrb[0].mxu0
        %v1387 = vadd.f32 %v836, %v1386
        %v1388 = vpop.f32.mrb[0].mxu0
        %v1389 = vpop.f32.mrb[0].mxu0
        %v1390 = vadd.f32 %v836, %v1389
        %v1391 = vpop.f32.mrb[0].mxu0
        %1392 = vmatprep.mubr.bf16.mxu0 %v720
        %1393 = vmatmul.mubr.bf16.gmra.mrb[0].mxu0 %v719
        %v1394 = vpop.f32.mrb[0].mxu0
        %v1395 = vadd.f32 %v836, %v1394
        %v1396 = vpop.f32.mrb[0].mxu0
        %v1397 = vpop.f32.mrb[0].mxu0
        %v1398 = vadd.f32 %v836, %v1397
        %v1399 = vpop.f32.mrb[0].mxu0
        %1400 = vdwg.mxu0
        %1401 = vmatprep.subr.bf16.mxu0 0
        %1402 = vmatpush1.bf16.msra.mxu0 %v1140
        %1403 = vmatprep.subr.bf16.mxu0 0
        %1404 = vmatpush1.bf16.msra.mxu0 %v1143
        %1405 = vmatprep.subr.bf16.mxu0 0
        %1406 = vmatpush1.bf16.msra.mxu0 %v1146
        %1407 = vmatprep.subr.bf16.mxu0 0
        %1408 = vmatpush1.bf16.msra.mxu0 %v1149
        %1409 = vmatprep.subr.bf16.mxu0 0
        %1410 = vmatpush1.bf16.msra.mxu0 %v1152
        %1411 = vmatprep.subr.bf16.mxu0 0
        %1412 = vmatpush1.bf16.msra.mxu0 %v1155
        %1413 = vmatprep.subr.bf16.mxu0 0
        %1414 = vmatpush1.bf16.msra.mxu0 %v1158
        %1415 = vmatprep.subr.bf16.mxu0 0
        %1416 = vmatpush1.bf16.msra.mxu0 %v1161
        %1417 = vmatprep.subr.bf16.mxu0 0
        %1418 = vmatpush1.bf16.msra.mxu0 %v1164
        %1419 = vmatprep.subr.bf16.mxu0 0
        %1420 = vmatpush1.bf16.msra.mxu0 0
        %1421 = vmatprep.subr.bf16.mxu0 0
        %1422 = vmatpush1.bf16.msra.mxu0 0
        %1423 = vmatprep.subr.bf16.mxu0 0
        %1424 = vmatpush1.bf16.msra.mxu0 0
        %1425 = vmatprep.subr.bf16.mxu0 0
        %1426 = vmatpush1.bf16.msra.mxu0 0
        %1427 = vmatprep.subr.bf16.mxu0 0
        %1428 = vmatpush1.bf16.msra.mxu0 0
        %1429 = vmatprep.subr.bf16.mxu0 0
        %1430 = vmatpush1.bf16.msra.mxu0 0
        %1431 = vmatprep.subr.bf16.mxu0 0
        %1432 = vmatpush1.bf16.msra.mxu0 0
        %1433 = vmatprep.mubr.bf16.mxu0 %v1241
        %1434 = vmatmul.mubr.bf16.gmra.mrb[0].mxu0 %v717
        %v1435 = vpop.f32.mrb[0].mxu0
        %v1436 = vadd.f32 %v1387, %v1435
        %v1437 = vpop.f32.mrb[0].mxu0
        %v1438 = vpop.f32.mrb[0].mxu0
        %v1439 = vadd.f32 %v1390, %v1438
        %v1440 = vpop.f32.mrb[0].mxu0
        %1441 = vmatprep.mubr.bf16.mxu0 %v1244
        %1442 = vmatmul.mubr.bf16.gmra.mrb[0].mxu0 %v721
        %v1443 = vpop.f32.mrb[0].mxu0
        %v1444 = vadd.f32 %v1395, %v1443
        %v1445 = vpop.f32.mrb[0].mxu0
        %v1446 = vpop.f32.mrb[0].mxu0
        %v1447 = vadd.f32 %v1398, %v1446
        %v1448 = vpop.f32.mrb[0].mxu0
        %1449 = vdwg.mxu0
        %v1450 = vmax.f32 %v1334, 0.0
        %v1451 = vmax.f32 %v1336, 0.0
        %v1452 = vmax.f32 %v1436, 0.0
        %v1453 = vmax.f32 %v1338, 0.0
        %v1454 = vmax.f32 %v1340, 0.0
        %v1455 = vmax.f32 %v1439, 0.0
        %v1456 = vmax.f32 %v1344, 0.0
        %v1457 = vmax.f32 %v1346, 0.0
        %v1458 = vmax.f32 %v1444, 0.0
        %v1459 = vmax.f32 %v1348, 0.0
        %v1460 = vmax.f32 %v1350, 0.0
        %v1461 = vmax.f32 %v1447, 0.0
        %v1462 = vpack.c.bf16 %v1453, %v1450
        %v1463 = vpack.c.bf16 %v1454, %v1451
        %v1464 = vpack.c.bf16 %v1455, %v1452
        %v1465 = vpack.c.bf16 %v1459, %v1456
        %v1466 = vpack.c.bf16 %v1460, %v1457
        %v1467 = vpack.c.bf16 %v1461, %v1458
        %v1468 = vld [vmem:[%s7] sm:$0xf]
        %v1469 = vld [vmem:[%s7 + $0x4] sm:$0xf]
        %v1470 = vld [vmem:[%s7 + $0x8] sm:$0xf]
        %v1471 = vld [vmem:[%s7 + $0xc] sm:$0xf]
        %v1472 = vld [vmem:[%s7 + $0x10] sm:$0xf]
        %v1473 = vld [vmem:[%s7 + $0x14] sm:$0xf]
        %v1474 = vld [vmem:[%s7 + $0x18] sm:$0xf]
        %v1475 = vld [vmem:[%s7 + $0x1c] sm:$0xf]
        %v1476 = vld [vmem:[%s7 + $0x20] sm:$0xf]
        %v1477 = vld [vmem:[%s7 + $0x24] sm:$0xf]
        %v1478 = vld [vmem:[%s7 + $0x28] sm:$0xf]
        %v1479 = vld [vmem:[%s7 + $0x2c] sm:$0xf]
        %v1480 = vld [vmem:[%s7 + $0x30] sm:$0xf]
        %v1481 = vld [vmem:[%s7 + $0x34] sm:$0xf]
        %v1482 = vld [vmem:[%s7 + $0x38] sm:$0xf]
        %v1483 = vld [vmem:[%s7 + $0x3c] sm:$0xf]
        %v1484 = vld [vmem:[%s7 + $0x40] sm:$0xf]
        %v1485 = vld [vmem:[%s7 + $0x44] sm:$0xf]
        %v1486 = vld [vmem:[%s7 + $0x48] sm:$0xf]
        %v1487 = vld [vmem:[%s7 + $0x4c] sm:$0xf]
        %v1488 = vld [vmem:[%s7 + $0x50] sm:$0xf]
        %v1489 = vld [vmem:[%s7 + $0x54] sm:$0xf]
        %v1490 = vld [vmem:[%s7 + $0x58] sm:$0xf]
        %v1491 = vld [vmem:[%s7 + $0x5c] sm:$0xf]
        %v1492 = vld [vmem:[%s7 + $0x60] sm:$0xf]
        %v1493 = vld [vmem:[%s7 + $0x64] sm:$0xf]
        %v1494 = vld [vmem:[%s7 + $0x68] sm:$0xf]
        %v1495 = vld [vmem:[%s7 + $0x6c] sm:$0xf]
        %v1496 = vld [vmem:[%s7 + $0x70] sm:$0xf]
        %v1497 = vld [vmem:[%s7 + $0x74] sm:$0xf]
        %v1498 = vld [vmem:[%s7 + $0x78] sm:$0xf]
        %v1499 = vld [vmem:[%s7 + $0x7c] sm:$0xf]
        %v1500 = vld [vmem:[%s7 + $0x80] sm:$0xf]
        %v1501 = vld [vmem:[%s7 + $0x84] sm:$0xf]
        %v1502 = vld [vmem:[%s7 + $0x88] sm:$0xf]
        %v1503 = vld [vmem:[%s7 + $0x8c] sm:$0xf]
        %v1504 = vld [vmem:[%s7 + $0x90] sm:$0xf]
        %v1505 = vld [vmem:[%s7 + $0x94] sm:$0x3]
        %v1506 = vld [vmem:[%s8] sm:$0x1]
        %v1508 = vlaneseq
        %v1509 = vshrl.u32 %v1508, 7
        %v1510 = vsub.s32 0, %v1509
        %v1511 = vrot.slane %v1506, %v1510
        %v1551 = vunpack.c.l.b16 %v1468
        %v1552 = vunpack.c.l.b16 %v1469
        %v1553 = vunpack.c.l.b16 %v1470
        %v1554 = vunpack.c.l.b16 %v1471
        %v1555 = vunpack.c.l.b16 %v1472
        %v1556 = vunpack.c.l.b16 %v1473
        %v1557 = vunpack.c.l.b16 %v1474
        %v1558 = vunpack.c.l.b16 %v1475
        %v1559 = vunpack.c.l.b16 %v1476
        %v1560 = vunpack.c.l.b16 %v1477
        %v1561 = vunpack.c.l.b16 %v1478
        %v1562 = vunpack.c.l.b16 %v1479
        %v1563 = vunpack.c.l.b16 %v1480
        %v1564 = vunpack.c.l.b16 %v1481
        %v1565 = vunpack.c.l.b16 %v1482
        %v1566 = vunpack.c.l.b16 %v1483
        %v1567 = vunpack.c.l.b16 %v1484
        %v1568 = vunpack.c.l.b16 %v1485
        %v1569 = vunpack.c.l.b16 %v1486
        %v1570 = vunpack.c.l.b16 %v1487
        %v1571 = vunpack.c.l.b16 %v1488
        %v1572 = vunpack.c.l.b16 %v1489
        %v1573 = vunpack.c.l.b16 %v1490
        %v1574 = vunpack.c.l.b16 %v1491
        %v1575 = vunpack.c.l.b16 %v1492
        %v1576 = vunpack.c.l.b16 %v1493
        %v1577 = vunpack.c.l.b16 %v1494
        %v1578 = vunpack.c.l.b16 %v1495
        %v1579 = vunpack.c.l.b16 %v1496
        %v1580 = vunpack.c.l.b16 %v1497
        %v1581 = vunpack.c.l.b16 %v1498
        %v1582 = vunpack.c.l.b16 %v1499
        %v1583 = vunpack.c.l.b16 %v1500
        %v1584 = vunpack.c.l.b16 %v1501
        %v1585 = vunpack.c.l.b16 %v1502
        %v1586 = vunpack.c.l.b16 %v1503
        %v1587 = vunpack.c.l.b16 %v1504
        %v1588 = vunpack.c.l.b16 %v1505
        %v1589 = vpack.c.b16 %v1552, %v1551
        %v1590 = vpack.c.b16 %v1554, %v1553
        %v1591 = vpack.c.b16 %v1556, %v1555
        %v1592 = vpack.c.b16 %v1558, %v1557
        %v1593 = vpack.c.b16 %v1560, %v1559
        %v1594 = vpack.c.b16 %v1562, %v1561
        %v1595 = vpack.c.b16 %v1564, %v1563
        %v1596 = vpack.c.b16 %v1566, %v1565
        %v1597 = vpack.c.b16 %v1568, %v1567
        %v1598 = vpack.c.b16 %v1570, %v1569
        %v1599 = vpack.c.b16 %v1572, %v1571
        %v1600 = vpack.c.b16 %v1574, %v1573
        %v1601 = vpack.c.b16 %v1576, %v1575
        %v1602 = vpack.c.b16 %v1578, %v1577
        %v1603 = vpack.c.b16 %v1580, %v1579
        %v1604 = vpack.c.b16 %v1582, %v1581
        %v1605 = vpack.c.b16 %v1584, %v1583
        %v1606 = vpack.c.b16 %v1586, %v1585
        %v1607 = vpack.c.b16 %v1588, %v1587
        %vm1626 = vcmask 359424
        %v1628 = vsel %vm1626, %v1464, 0
        %v1631 = vsel %vm1626, %v1467, 0
        %vm1633 = vcmask 1045504
        %v1635 = vsel %vm1633, %v1607, 0
        %1637 = vmatprep.subr.bf16.mxu0 0
        %1638 = vmatpush1.bf16.msra.mxu0 %v1589
        %1639 = vmatprep.subr.bf16.mxu0 0
        %1640 = vmatpush1.bf16.msra.mxu0 %v1590
        %1641 = vmatprep.subr.bf16.mxu0 0
        %1642 = vmatpush1.bf16.msra.mxu0 %v1591
        %1643 = vmatprep.subr.bf16.mxu0 0
        %1644 = vmatpush1.bf16.msra.mxu0 %v1592
        %1645 = vmatprep.subr.bf16.mxu0 0
        %1646 = vmatpush1.bf16.msra.mxu0 %v1593
        %1647 = vmatprep.subr.bf16.mxu0 0
        %1648 = vmatpush1.bf16.msra.mxu0 %v1594
        %1649 = vmatprep.subr.bf16.mxu0 0
        %1650 = vmatpush1.bf16.msra.mxu0 %v1595
        %1651 = vmatprep.subr.bf16.mxu0 0
        %1652 = vmatpush1.bf16.msra.mxu0 %v1596
        %1653 = vmatprep.subr.bf16.mxu0 0
        %1654 = vmatpush1.bf16.msra.mxu0 %v1597
        %1655 = vmatprep.subr.bf16.mxu0 0
        %1656 = vmatpush1.bf16.msra.mxu0 %v1598
        %1657 = vmatprep.subr.bf16.mxu0 0
        %1658 = vmatpush1.bf16.msra.mxu0 %v1599
        %1659 = vmatprep.subr.bf16.mxu0 0
        %1660 = vmatpush1.bf16.msra.mxu0 %v1600
        %1661 = vmatprep.subr.bf16.mxu0 0
        %1662 = vmatpush1.bf16.msra.mxu0 %v1601
        %1663 = vmatprep.subr.bf16.mxu0 0
        %1664 = vmatpush1.bf16.msra.mxu0 %v1602
        %1665 = vmatprep.subr.bf16.mxu0 0
        %1666 = vmatpush1.bf16.msra.mxu0 %v1603
        %1667 = vmatprep.subr.bf16.mxu0 0
        %1668 = vmatpush1.bf16.msra.mxu0 %v1604
        %1669 = vmatprep.mubr.bf16.mxu0 %v1463
        %1670 = vmatmul.mubr.bf16.gmra.mrb[0].mxu0 %v1462
        %v1671 = vpop.f32.mrb[0].mxu0
        %v1672 = vadd.f32 %v1511, %v1671
        %v1673 = vpop.f32.mrb[0].mxu0
        %v1674 = vpop.f32.mrb[0].mxu0
        %v1675 = vadd.f32 %v1511, %v1674
        %v1676 = vpop.f32.mrb[0].mxu0
        %1677 = vmatprep.mubr.bf16.mxu0 %v1466
        %1678 = vmatmul.mubr.bf16.gmra.mrb[0].mxu0 %v1465
        %v1679 = vpop.f32.mrb[0].mxu0
        %v1680 = vadd.f32 %v1511, %v1679
        %v1681 = vpop.f32.mrb[0].mxu0
        %v1682 = vpop.f32.mrb[0].mxu0
        %v1683 = vadd.f32 %v1511, %v1682
        %v1684 = vpop.f32.mrb[0].mxu0
        %1685 = vdwg.mxu0
        %1686 = vmatprep.subr.bf16.mxu0 0
        %1687 = vmatpush1.bf16.msra.mxu0 %v1605
        %1688 = vmatprep.subr.bf16.mxu0 0
        %1689 = vmatpush1.bf16.msra.mxu0 %v1606
        %1690 = vmatprep.subr.bf16.mxu0 0
        %1691 = vmatpush1.bf16.msra.mxu0 %v1635
        %1692 = vmatprep.subr.bf16.mxu0 0
        %1693 = vmatpush1.bf16.msra.mxu0 0
        %1694 = vmatprep.subr.bf16.mxu0 0
        %1695 = vmatpush1.bf16.msra.mxu0 0
        %1696 = vmatprep.subr.bf16.mxu0 0
        %1697 = vmatpush1.bf16.msra.mxu0 0
        %1698 = vmatprep.subr.bf16.mxu0 0
        %1699 = vmatpush1.bf16.msra.mxu0 0
        %1700 = vmatprep.subr.bf16.mxu0 0
        %1701 = vmatpush1.bf16.msra.mxu0 0
        %1702 = vmatprep.subr.bf16.mxu0 0
        %1703 = vmatpush1.bf16.msra.mxu0 0
        %1704 = vmatprep.subr.bf16.mxu0 0
        %1705 = vmatpush1.bf16.msra.mxu0 0
        %1706 = vmatprep.subr.bf16.mxu0 0
        %1707 = vmatpush1.bf16.msra.mxu0 0
        %1708 = vmatprep.subr.bf16.mxu0 0
        %1709 = vmatpush1.bf16.msra.mxu0 0
        %1710 = vmatprep.subr.bf16.mxu0 0
        %1711 = vmatpush1.bf16.msra.mxu0 0
        %1712 = vmatprep.subr.bf16.mxu0 0
        %1713 = vmatpush1.bf16.msra.mxu0 0
        %1714 = vmatprep.subr.bf16.mxu0 0
        %1715 = vmatpush1.bf16.msra.mxu0 0
        %1716 = vmatprep.subr.bf16.mxu0 0
        %1717 = vmatpush1.bf16.msra.mxu0 0
        %1718 = vmatprep.mubr.bf16.mxu0 0
        %1719 = vmatmul.mubr.bf16.gmra.mrb[0].mxu0 %v1628
        %v1720 = vpop.f32.mrb[0].mxu0
        %v1721 = vadd.f32 %v1672, %v1720
        %v1722 = vpop.f32.mrb[0].mxu0
        %v1723 = vpop.f32.mrb[0].mxu0
        %v1724 = vadd.f32 %v1675, %v1723
        %v1725 = vpop.f32.mrb[0].mxu0
        %1726 = vmatprep.mubr.bf16.mxu0 0
        %1727 = vmatmul.mubr.bf16.gmra.mrb[0].mxu0 %v1631
        %v1728 = vpop.f32.mrb[0].mxu0
        %v1729 = vadd.f32 %v1680, %v1728
        %v1730 = vpop.f32.mrb[0].mxu0
        %v1731 = vpop.f32.mrb[0].mxu0
        %v1732 = vadd.f32 %v1683, %v1731
        %v1733 = vpop.f32.mrb[0].mxu0
        %1734 = vdwg.mxu0
        %v1735 = vtanh.pop %v1721
        %v1736 = vtanh.pop %v1724
        %v1737 = vtanh.pop %v1729
        %v1738 = vtanh.pop %v1732
        %v1739 = vmul.f32 %v1735, 0.05
        %v1740 = vmul.f32 %v1736, 0.05
        %v1741 = vmul.f32 %v1737, 0.05
        %v1742 = vmul.f32 %v1738, 0.05
        %v1743 = vadd.f32 %v1739, %v374
        %v1744 = vadd.f32 %v1740, %v375
        %v1745 = vadd.f32 %v1741, %v376
        %v1746 = vadd.f32 %v1742, %v377
        %v1747 = vmax.f32 %v1743, -1.0
        %v1748 = vmax.f32 %v1744, -1.0
        %v1749 = vmax.f32 %v1745, -1.0
        %v1750 = vmax.f32 %v1746, -1.0
        %v1751 = vmin.f32 %v1747, 1.0
        %v1752 = vmin.f32 %v1748, 1.0
        %v1753 = vmin.f32 %v1749, 1.0
        %v1754 = vmin.f32 %v1750, 1.0
        %1755 = vst.msk [vmem:[%s371] sm:$0xff] %vm402, %v1751
        %1756 = vst.msk [vmem:[%s371 + $0x8] sm:$0xff] %vm402, %v1752
        %1757 = vst.msk [vmem:[%s371 + $0x10] sm:$0xff] %vm402, %v1753
        %1758 = vst.msk [vmem:[%s371 + $0x18] sm:$0xff] %vm402, %v1754
        %s1759 = smul.u32 4, %s21
        %p1760 = scmp.lt.s32.totalorder %s1759, 7
        %s1761 = scalar_select %p1760, %s1759, 7
        %s1762 = smul.addr %s1761, 8
        %s1763 = scalar_lea.vmem %s9, %s1762
        // Predicated region
        $region61: #{tpu_custom_call.1} parent=55 // pred_check
          %p1764 = pneg %p238
        $region62: #{tpu_custom_call.1} parent=55 // pred_check_branch
          %1766 = sbr.rel (%p1764) target = $region64
        $region63: #{tpu_custom_call.1} parent=55 // pred_region
          %s1767 = smul.u32 4, %s21
        $region64: #{tpu_custom_call.1} parent=55 // pred_fallthru
          _
      $region56: #{tpu_custom_call.1} parent=5 // pred_fallthru
        _
      %p1768 = scmp.le.s32.totalorder 2, %s16
      // Predicated region
      $region65: #{tpu_custom_call.1} parent=5 // pred_check
        %p1769 = pneg %p1768
      $region66: #{tpu_custom_call.1} parent=5 // pred_check_branch
        %1771 = sbr.rel (%p1769) target = $region68
      $region67: #{tpu_custom_call.1} parent=5 // pred_region
        %s1772 = ssub.s32 %s16, 2
        // Predicated region
        $region69: #{tpu_custom_call.1} parent=67 // pred_check
          %p1773 = pneg %p244
        $region70: #{tpu_custom_call.1} parent=67 // pred_check_branch
          %1775 = sbr.rel (%p1773) target = $region72
        $region71: #{tpu_custom_call.1} parent=67 // pred_region
          %s1776 = smul.u32 4, %s22
          %p1777 = scmp.lt.s32.totalorder %s1776, 7
          %s1778 = scalar_select %p1777, %s1776, 7
          %s1779 = smul.addr %s1778, 8
          %s1780 = scalar_lea.vmem %s9, %s1779
        $region72: #{tpu_custom_call.1} parent=67 // pred_fallthru
          _
      $region68: #{tpu_custom_call.1} parent=5 // pred_fallthru
        _
    $region6: #{tpu_custom_call.1} parent=1 // loop_footer
      %s20 = sadd.s32 1, %s16
    $region7: #{tpu_custom_call.1} parent=1 // loop_footer_branch
      %15 = sbr.rel target = $region3
    $region8: #{tpu_custom_call.1} parent=1 // loop_exit
      _
    %1781 = vsyncpa [#allocation3], 1
    %s1782 = scalar_lea.sflag [#allocation3], 1
    %1783 = vsyncpa %s1782, 1

</llo_original>
